<compile_context>
chip_gen: v6e
topology: v6e:2x2x1
jax: 0.10.0
libtpu: 0.0.40
codegen_flags: <defaults>
</compile_context>

<pallas_src>
import functools

import jax
import jax.numpy as jnp
from jax.experimental import pallas as pl
from jax.experimental.pallas import tpu as pltpu

_LANE = 128


def _conv_bn_relu_kernel(x_ref, w_ref, bias_ref, o_ref,
                         *, kh_size, kw_size, stride, th):
    # x_ref:    (H_pad, W_pad, Cin_p)    whole padded image of one batch elem
    # w_ref:    (KH, KW, Cin_p, Cout_p)  BN scale already folded in
    # bias_ref: (1, Cout_p)              folded BN bias
    # o_ref:    (TH, W_out, Cout_p)      one row-tile of the output
    t = pl.program_id(1)
    _, w_out, c_out = o_ref.shape
    c_in = x_ref.shape[-1]

    # First padded-input row feeding this output row tile (aligned hint).
    row_base = pl.multiple_of(t * (th * stride), th * stride)

    acc = jnp.zeros((th * w_out, c_out), jnp.float32)
    for kh in range(kh_size):
        for kw in range(kw_size):
            if stride == 1:
                patch = x_ref[pl.ds(row_base + kh, th), pl.ds(kw, w_out), :]
            else:
                patch = x_ref[pl.ds(row_base + kh, th, stride),
                              pl.ds(kw, w_out, stride), :]
            # (TH*W_out, Cin_p) @ (Cin_p, Cout_p) -> lane-dense MXU matmul.
            acc += jnp.dot(patch.reshape(th * w_out, c_in), w_ref[kh, kw],
                           preferred_element_type=jnp.float32)

    y = jnp.maximum(acc + bias_ref[...], 0.0)          # fused BN bias + ReLU
    o_ref[...] = y.reshape(th, w_out, c_out).astype(o_ref.dtype)


def conv_bn_relu(x_nchw, weight, gamma, beta, running_mean, running_var,
                 *, stride=1, padding=0, eps=1e-5, block_h=8):
    """ConvBNReLU forward. x_nchw: (N, Cin, H, W); weight: (Cout, Cin, KH, KW)."""
    n, c_in, h, w = x_nchw.shape
    c_out, c_in_w, kh, kw = weight.shape
    assert c_in_w == c_in  # TODO(synk): groups != 1 (grouped conv) not supported

    h_out = (h + 2 * padding - kh) // stride + 1
    w_out = (w + 2 * padding - kw) // stride + 1

    c_in_p = ((c_in + _LANE - 1) // _LANE) * _LANE
    c_out_p = ((c_out + _LANE - 1) // _LANE) * _LANE

    # Row-tile size: largest divisor of h_out that is <= block_h.
    th = h_out
    for cand in range(min(block_h, h_out), 0, -1):
        if h_out % cand == 0:
            th = cand
            break

    # ---- wrapper glue: layout, channel/spatial padding, BN folding ----
    # TODO(synk): in a full network keep NHWC end-to-end to avoid these
    # per-layer transposes/pads (each is an extra HBM pass).
    x_nhwc = jnp.transpose(x_nchw, (0, 2, 3, 1)).astype(jnp.float32)
    x_pad = jnp.pad(x_nhwc, ((0, 0), (padding, padding), (padding, padding),
                             (0, c_in_p - c_in)))

    scale = (gamma / jnp.sqrt(running_var + eps)).astype(jnp.float32)
    bias = (beta.astype(jnp.float32) - running_mean.astype(jnp.float32) * scale)

    # Fold BN scale into the weights (done once in XLA, not per output pixel).
    w_hwio = jnp.transpose(weight, (2, 3, 1, 0)).astype(jnp.float32)
    w_hwio = w_hwio * scale[None, None, None, :]
    w_p = jnp.pad(w_hwio, ((0, 0), (0, 0),
                           (0, c_in_p - c_in), (0, c_out_p - c_out)))
    bias_p = jnp.pad(bias, (0, c_out_p - c_out)).reshape(1, c_out_p)

    h_pad_dim = h + 2 * padding
    w_pad_dim = w + 2 * padding
    grid = (n, h_out // th)

    kernel = functools.partial(_conv_bn_relu_kernel,
                               kh_size=kh, kw_size=kw, stride=stride, th=th)

    cost = pl.CostEstimate(
        flops=2 * n * h_out * w_out * kh * kw * c_in_p * c_out_p,
        transcendentals=0,
        bytes_accessed=int(x_pad.size * 4 + w_p.size * 4
                           + n * h_out * w_out * c_out_p * 4),
    )

    out_nhwc = pl.pallas_call(
        kernel,
        out_shape=jax.ShapeDtypeStruct((n, h_out, w_out, c_out_p), jnp.float32),
        grid=grid,
        in_specs=[
            # Whole padded image per batch element; block index constant in t,
            # so it is fetched once per batch element and reused by row tiles.
            pl.BlockSpec((None, h_pad_dim, w_pad_dim, c_in_p),
                         lambda b, t: (b, 0, 0, 0)),
            pl.BlockSpec((kh, kw, c_in_p, c_out_p), lambda b, t: (0, 0, 0, 0)),
            pl.BlockSpec((1, c_out_p), lambda b, t: (0, 0)),
        ],
        out_specs=pl.BlockSpec((None, th, w_out, c_out_p),
                               lambda b, t: (b, t, 0, 0)),
        compiler_params=pltpu.CompilerParams(
            dimension_semantics=("parallel", "parallel")),
        cost_estimate=cost,
    )(x_pad, w_p, bias_p)

    out_nhwc = out_nhwc[..., :c_out]                 # drop channel padding
    return jnp.transpose(out_nhwc, (0, 3, 1, 2))     # back to NCHW


def _reference(x_nchw, weight, gamma, beta, running_mean, running_var,
               *, stride, padding, eps=1e-5):
    y = jax.lax.conv_general_dilated(
        x_nchw.astype(jnp.float32), weight.astype(jnp.float32),
        window_strides=(stride, stride),
        padding=((padding, padding), (padding, padding)),
        dimension_numbers=("NCHW", "OIHW", "NCHW"))
    scale = gamma / jnp.sqrt(running_var + eps)
    bias = beta - running_mean * scale
    y = y * scale[None, :, None, None] + bias[None, :, None, None]
    return jnp.maximum(y, 0.0)


if __name__ == "__main__":
    # Config consistent with ConvBNReLU(in_channels=4, out_channels=8,
    #                                    kernel_size=3, stride=1, padding=1)
    N, C_IN, H, W = 2, 4, 16, 16
    C_OUT, K, STRIDE, PAD = 8, 3, 1, 1

    key = jax.random.PRNGKey(0)
    kx, kw_, kg, kb, km, kv = jax.random.split(key, 6)

    x = jax.random.normal(kx, (N, C_IN, H, W), jnp.float32)
    weight = jax.random.normal(kw_, (C_OUT, C_IN, K, K), jnp.float32) * 0.1
    gamma = jax.random.normal(kg, (C_OUT,), jnp.float32) * 0.1 + 1.0
    beta = jax.random.normal(kb, (C_OUT,), jnp.float32) * 0.1
    running_mean = jax.random.normal(km, (C_OUT,), jnp.float32) * 0.1
    running_var = jax.random.uniform(kv, (C_OUT,), jnp.float32, 0.5, 1.5)

    out = conv_bn_relu(x, weight, gamma, beta, running_mean, running_var,
                       stride=STRIDE, padding=PAD)
    out = jax.block_until_ready(out)

    ref = _reference(x, weight, gamma, beta, running_mean, running_var,
                     stride=STRIDE, padding=PAD)
    assert out.shape == (N, C_OUT, H, W)
    assert jnp.max(jnp.abs(out - ref)) < 2e-4

    print("KERNEL_OK")
</pallas_src>

<mosaic_0001>
module attributes {stable_mosaic.version = 11 : i64} {
  func.func @_conv_bn_relu_kernel(%arg0: i32, %arg1: i32, %arg2: memref<1x18x18x128xf32, #tpu.memory_space<vmem>>, %arg3: memref<3x3x128x128xf32, #tpu.memory_space<vmem>>, %arg4: memref<1x128xf32, #tpu.memory_space<vmem>>, %arg5: memref<1x8x16x128xf32, #tpu.memory_space<vmem>>) attributes {dimension_semantics = [#tpu.dimension_semantics<parallel>, #tpu.dimension_semantics<parallel>], iteration_bounds = array<i64: 2, 2>, scalar_prefetch = 0 : i64, scratch_operands = 0 : i64, tpu.core_type = #tpu.core_type<tc>, window_params = [{transform_indices = @transform_0, window_bounds = array<i64: 1, 18, 18, 128>}, {pipeline_mode = #tpu.pipeline_mode<synchronous>, transform_indices = @transform_1, window_bounds = array<i64: 3, 3, 128, 128>}, {pipeline_mode = #tpu.pipeline_mode<synchronous>, transform_indices = @transform_2, window_bounds = array<i64: 1, 128>}, {transform_indices = @transform_3, window_bounds = array<i64: 1, 8, 16, 128>}]} {
    %c8_i32 = arith.constant 8 : i32
    %0 = arith.muli %arg1, %c8_i32 : i32
    %1 = tpu.assume_multiple %0, 8 : i32
    %cst = arith.constant 0.000000e+00 : f32
    %2 = vector.broadcast %cst : f32 to vector<128x128xf32>
    %c0_i32 = arith.constant 0 : i32
    %3 = arith.addi %1, %c0_i32 : i32
    %c0 = arith.constant 0 : index
    %4 = arith.index_cast %3 : i32 to index
    %c0_0 = arith.constant 0 : index
    %c0_1 = arith.constant 0 : index
    %5 = vector.load %arg2[%c0, %4, %c0_0, %c0_1] : memref<1x18x18x128xf32, #tpu.memory_space<vmem>>, vector<1x8x16x128xf32>
    %6 = vector.shape_cast %5 : vector<1x8x16x128xf32> to vector<8x16x128xf32>
    %7 = vector.shape_cast %6 : vector<8x16x128xf32> to vector<128x128xf32>
    %c0_2 = arith.constant 0 : index
    %c0_3 = arith.constant 0 : index
    %c0_4 = arith.constant 0 : index
    %c0_5 = arith.constant 0 : index
    %8 = vector.load %arg3[%c0_2, %c0_3, %c0_4, %c0_5] : memref<3x3x128x128xf32, #tpu.memory_space<vmem>>, vector<1x1x128x128xf32>
    %9 = vector.shape_cast %8 : vector<1x1x128x128xf32> to vector<128x128xf32>
    %cst_6 = arith.constant dense<0.000000e+00> : vector<128x128xf32>
    %10 = tpu.matmul %7, %9, %cst_6 {dimension_numbers = #tpu.dot_dimension_numbers<[1], [0], [0], [1], [0, 0, 1, 1], [], []>} : vector<128x128xf32>, vector<128x128xf32>, vector<128x128xf32> -> vector<128x128xf32>
    %11 = arith.addf %2, %10 : vector<128x128xf32>
    %c0_i32_7 = arith.constant 0 : i32
    %12 = arith.addi %1, %c0_i32_7 : i32
    %c0_8 = arith.constant 0 : index
    %13 = arith.index_cast %12 : i32 to index
    %c1 = arith.constant 1 : index
    %c0_9 = arith.constant 0 : index
    %14 = vector.load %arg2[%c0_8, %13, %c1, %c0_9] : memref<1x18x18x128xf32, #tpu.memory_space<vmem>>, vector<1x8x16x128xf32>
    %15 = vector.shape_cast %14 : vector<1x8x16x128xf32> to vector<8x16x128xf32>
    %16 = vector.shape_cast %15 : vector<8x16x128xf32> to vector<128x128xf32>
    %c0_10 = arith.constant 0 : index
    %c1_11 = arith.constant 1 : index
    %c0_12 = arith.constant 0 : index
    %c0_13 = arith.constant 0 : index
    %17 = vector.load %arg3[%c0_10, %c1_11, %c0_12, %c0_13] : memref<3x3x128x128xf32, #tpu.memory_space<vmem>>, vector<1x1x128x128xf32>
    %18 = vector.shape_cast %17 : vector<1x1x128x128xf32> to vector<128x128xf32>
    %cst_14 = arith.constant dense<0.000000e+00> : vector<128x128xf32>
    %19 = tpu.matmul %16, %18, %cst_14 {dimension_numbers = #tpu.dot_dimension_numbers<[1], [0], [0], [1], [0, 0, 1, 1], [], []>} : vector<128x128xf32>, vector<128x128xf32>, vector<128x128xf32> -> vector<128x128xf32>
    %20 = arith.addf %11, %19 : vector<128x128xf32>
    %c0_i32_15 = arith.constant 0 : i32
    %21 = arith.addi %1, %c0_i32_15 : i32
    %c0_16 = arith.constant 0 : index
    %22 = arith.index_cast %21 : i32 to index
    %c2 = arith.constant 2 : index
    %c0_17 = arith.constant 0 : index
    %23 = vector.load %arg2[%c0_16, %22, %c2, %c0_17] : memref<1x18x18x128xf32, #tpu.memory_space<vmem>>, vector<1x8x16x128xf32>
    %24 = vector.shape_cast %23 : vector<1x8x16x128xf32> to vector<8x16x128xf32>
    %25 = vector.shape_cast %24 : vector<8x16x128xf32> to vector<128x128xf32>
    %c0_18 = arith.constant 0 : index
    %c2_19 = arith.constant 2 : index
    %c0_20 = arith.constant 0 : index
    %c0_21 = arith.constant 0 : index
    %26 = vector.load %arg3[%c0_18, %c2_19, %c0_20, %c0_21] : memref<3x3x128x128xf32, #tpu.memory_space<vmem>>, vector<1x1x128x128xf32>
    %27 = vector.shape_cast %26 : vector<1x1x128x128xf32> to vector<128x128xf32>
    %cst_22 = arith.constant dense<0.000000e+00> : vector<128x128xf32>
    %28 = tpu.matmul %25, %27, %cst_22 {dimension_numbers = #tpu.dot_dimension_numbers<[1], [0], [0], [1], [0, 0, 1, 1], [], []>} : vector<128x128xf32>, vector<128x128xf32>, vector<128x128xf32> -> vector<128x128xf32>
    %29 = arith.addf %20, %28 : vector<128x128xf32>
    %c1_i32 = arith.constant 1 : i32
    %30 = arith.addi %1, %c1_i32 : i32
    %c0_23 = arith.constant 0 : index
    %31 = arith.index_cast %30 : i32 to index
    %c0_24 = arith.constant 0 : index
    %c0_25 = arith.constant 0 : index
    %32 = vector.load %arg2[%c0_23, %31, %c0_24, %c0_25] : memref<1x18x18x128xf32, #tpu.memory_space<vmem>>, vector<1x8x16x128xf32>
    %33 = vector.shape_cast %32 : vector<1x8x16x128xf32> to vector<8x16x128xf32>
    %34 = vector.shape_cast %33 : vector<8x16x128xf32> to vector<128x128xf32>
    %c1_26 = arith.constant 1 : index
    %c0_27 = arith.constant 0 : index
    %c0_28 = arith.constant 0 : index
    %c0_29 = arith.constant 0 : index
    %35 = vector.load %arg3[%c1_26, %c0_27, %c0_28, %c0_29] : memref<3x3x128x128xf32, #tpu.memory_space<vmem>>, vector<1x1x128x128xf32>
    %36 = vector.shape_cast %35 : vector<1x1x128x128xf32> to vector<128x128xf32>
    %cst_30 = arith.constant dense<0.000000e+00> : vector<128x128xf32>
    %37 = tpu.matmul %34, %36, %cst_30 {dimension_numbers = #tpu.dot_dimension_numbers<[1], [0], [0], [1], [0, 0, 1, 1], [], []>} : vector<128x128xf32>, vector<128x128xf32>, vector<128x128xf32> -> vector<128x128xf32>
    %38 = arith.addf %29, %37 : vector<128x128xf32>
    %c1_i32_31 = arith.constant 1 : i32
    %39 = arith.addi %1, %c1_i32_31 : i32
    %c0_32 = arith.constant 0 : index
    %40 = arith.index_cast %39 : i32 to index
    %c1_33 = arith.constant 1 : index
    %c0_34 = arith.constant 0 : index
    %41 = vector.load %arg2[%c0_32, %40, %c1_33, %c0_34] : memref<1x18x18x128xf32, #tpu.memory_space<vmem>>, vector<1x8x16x128xf32>
    %42 = vector.shape_cast %41 : vector<1x8x16x128xf32> to vector<8x16x128xf32>
    %43 = vector.shape_cast %42 : vector<8x16x128xf32> to vector<128x128xf32>
    %c1_35 = arith.constant 1 : index
    %c1_36 = arith.constant 1 : index
    %c0_37 = arith.constant 0 : index
    %c0_38 = arith.constant 0 : index
    %44 = vector.load %arg3[%c1_35, %c1_36, %c0_37, %c0_38] : memref<3x3x128x128xf32, #tpu.memory_space<vmem>>, vector<1x1x128x128xf32>
    %45 = vector.shape_cast %44 : vector<1x1x128x128xf32> to vector<128x128xf32>
    %cst_39 = arith.constant dense<0.000000e+00> : vector<128x128xf32>
    %46 = tpu.matmul %43, %45, %cst_39 {dimension_numbers = #tpu.dot_dimension_numbers<[1], [0], [0], [1], [0, 0, 1, 1], [], []>} : vector<128x128xf32>, vector<128x128xf32>, vector<128x128xf32> -> vector<128x128xf32>
    %47 = arith.addf %38, %46 : vector<128x128xf32>
    %c1_i32_40 = arith.constant 1 : i32
    %48 = arith.addi %1, %c1_i32_40 : i32
    %c0_41 = arith.constant 0 : index
    %49 = arith.index_cast %48 : i32 to index
    %c2_42 = arith.constant 2 : index
    %c0_43 = arith.constant 0 : index
    %50 = vector.load %arg2[%c0_41, %49, %c2_42, %c0_43] : memref<1x18x18x128xf32, #tpu.memory_space<vmem>>, vector<1x8x16x128xf32>
    %51 = vector.shape_cast %50 : vector<1x8x16x128xf32> to vector<8x16x128xf32>
    %52 = vector.shape_cast %51 : vector<8x16x128xf32> to vector<128x128xf32>
    %c1_44 = arith.constant 1 : index
    %c2_45 = arith.constant 2 : index
    %c0_46 = arith.constant 0 : index
    %c0_47 = arith.constant 0 : index
    %53 = vector.load %arg3[%c1_44, %c2_45, %c0_46, %c0_47] : memref<3x3x128x128xf32, #tpu.memory_space<vmem>>, vector<1x1x128x128xf32>
    %54 = vector.shape_cast %53 : vector<1x1x128x128xf32> to vector<128x128xf32>
    %cst_48 = arith.constant dense<0.000000e+00> : vector<128x128xf32>
    %55 = tpu.matmul %52, %54, %cst_48 {dimension_numbers = #tpu.dot_dimension_numbers<[1], [0], [0], [1], [0, 0, 1, 1], [], []>} : vector<128x128xf32>, vector<128x128xf32>, vector<128x128xf32> -> vector<128x128xf32>
    %56 = arith.addf %47, %55 : vector<128x128xf32>
    %c2_i32 = arith.constant 2 : i32
    %57 = arith.addi %1, %c2_i32 : i32
    %c0_49 = arith.constant 0 : index
    %58 = arith.index_cast %57 : i32 to index
    %c0_50 = arith.constant 0 : index
    %c0_51 = arith.constant 0 : index
    %59 = vector.load %arg2[%c0_49, %58, %c0_50, %c0_51] : memref<1x18x18x128xf32, #tpu.memory_space<vmem>>, vector<1x8x16x128xf32>
    %60 = vector.shape_cast %59 : vector<1x8x16x128xf32> to vector<8x16x128xf32>
    %61 = vector.shape_cast %60 : vector<8x16x128xf32> to vector<128x128xf32>
    %c2_52 = arith.constant 2 : index
    %c0_53 = arith.constant 0 : index
    %c0_54 = arith.constant 0 : index
    %c0_55 = arith.constant 0 : index
    %62 = vector.load %arg3[%c2_52, %c0_53, %c0_54, %c0_55] : memref<3x3x128x128xf32, #tpu.memory_space<vmem>>, vector<1x1x128x128xf32>
    %63 = vector.shape_cast %62 : vector<1x1x128x128xf32> to vector<128x128xf32>
    %cst_56 = arith.constant dense<0.000000e+00> : vector<128x128xf32>
    %64 = tpu.matmul %61, %63, %cst_56 {dimension_numbers = #tpu.dot_dimension_numbers<[1], [0], [0], [1], [0, 0, 1, 1], [], []>} : vector<128x128xf32>, vector<128x128xf32>, vector<128x128xf32> -> vector<128x128xf32>
    %65 = arith.addf %56, %64 : vector<128x128xf32>
    %c2_i32_57 = arith.constant 2 : i32
    %66 = arith.addi %1, %c2_i32_57 : i32
    %c0_58 = arith.constant 0 : index
    %67 = arith.index_cast %66 : i32 to index
    %c1_59 = arith.constant 1 : index
    %c0_60 = arith.constant 0 : index
    %68 = vector.load %arg2[%c0_58, %67, %c1_59, %c0_60] : memref<1x18x18x128xf32, #tpu.memory_space<vmem>>, vector<1x8x16x128xf32>
    %69 = vector.shape_cast %68 : vector<1x8x16x128xf32> to vector<8x16x128xf32>
    %70 = vector.shape_cast %69 : vector<8x16x128xf32> to vector<128x128xf32>
    %c2_61 = arith.constant 2 : index
    %c1_62 = arith.constant 1 : index
    %c0_63 = arith.constant 0 : index
    %c0_64 = arith.constant 0 : index
    %71 = vector.load %arg3[%c2_61, %c1_62, %c0_63, %c0_64] : memref<3x3x128x128xf32, #tpu.memory_space<vmem>>, vector<1x1x128x128xf32>
    %72 = vector.shape_cast %71 : vector<1x1x128x128xf32> to vector<128x128xf32>
    %cst_65 = arith.constant dense<0.000000e+00> : vector<128x128xf32>
    %73 = tpu.matmul %70, %72, %cst_65 {dimension_numbers = #tpu.dot_dimension_numbers<[1], [0], [0], [1], [0, 0, 1, 1], [], []>} : vector<128x128xf32>, vector<128x128xf32>, vector<128x128xf32> -> vector<128x128xf32>
    %74 = arith.addf %65, %73 : vector<128x128xf32>
    %c2_i32_66 = arith.constant 2 : i32
    %75 = arith.addi %1, %c2_i32_66 : i32
    %c0_67 = arith.constant 0 : index
    %76 = arith.index_cast %75 : i32 to index
    %c2_68 = arith.constant 2 : index
    %c0_69 = arith.constant 0 : index
    %77 = vector.load %arg2[%c0_67, %76, %c2_68, %c0_69] : memref<1x18x18x128xf32, #tpu.memory_space<vmem>>, vector<1x8x16x128xf32>
    %78 = vector.shape_cast %77 : vector<1x8x16x128xf32> to vector<8x16x128xf32>
    %79 = vector.shape_cast %78 : vector<8x16x128xf32> to vector<128x128xf32>
    %c2_70 = arith.constant 2 : index
    %c2_71 = arith.constant 2 : index
    %c0_72 = arith.constant 0 : index
    %c0_73 = arith.constant 0 : index
    %80 = vector.load %arg3[%c2_70, %c2_71, %c0_72, %c0_73] : memref<3x3x128x128xf32, #tpu.memory_space<vmem>>, vector<1x1x128x128xf32>
    %81 = vector.shape_cast %80 : vector<1x1x128x128xf32> to vector<128x128xf32>
    %cst_74 = arith.constant dense<0.000000e+00> : vector<128x128xf32>
    %82 = tpu.matmul %79, %81, %cst_74 {dimension_numbers = #tpu.dot_dimension_numbers<[1], [0], [0], [1], [0, 0, 1, 1], [], []>} : vector<128x128xf32>, vector<128x128xf32>, vector<128x128xf32> -> vector<128x128xf32>
    %83 = arith.addf %74, %82 : vector<128x128xf32>
    %c0_75 = arith.constant 0 : index
    %c0_76 = arith.constant 0 : index
    %84 = vector.load %arg4[%c0_75, %c0_76] : memref<1x128xf32, #tpu.memory_space<vmem>>, vector<1x128xf32>
    %85 = vector.broadcast %84 : vector<1x128xf32> to vector<128x128xf32>
    %86 = arith.addf %83, %85 : vector<128x128xf32>
    %cst_77 = arith.constant 0.000000e+00 : f32
    %87 = vector.broadcast %cst_77 : f32 to vector<128x128xf32>
    %88 = arith.maximumf %86, %87 : vector<128x128xf32>
    %89 = vector.shape_cast %88 : vector<128x128xf32> to vector<8x16x128xf32>
    %c0_78 = arith.constant 0 : index
    %c0_79 = arith.constant 0 : index
    %c0_80 = arith.constant 0 : index
    %c0_81 = arith.constant 0 : index
    %90 = vector.load %arg5[%c0_78, %c0_79, %c0_80, %c0_81] : memref<1x8x16x128xf32, #tpu.memory_space<vmem>>, vector<1x8x16x128xf32>
    %91 = vector.shape_cast %90 : vector<1x8x16x128xf32> to vector<8x16x128xf32>
    %92 = vector.shape_cast %89 : vector<8x16x128xf32> to vector<1x8x16x128xf32>
    tpu.vector_store %arg5[%c0_78, %c0_79, %c0_80, %c0_81], %92 {strides = array<i32>} : memref<1x8x16x128xf32, #tpu.memory_space<vmem>>, vector<1x8x16x128xf32>,
    return
  }
  func.func @transform_0(%arg0: i32, %arg1: i32) -> (i32, i32, i32, i32) {
    %c0_i32 = arith.constant 0 : i32
    %c0_i32_0 = arith.constant 0 : i32
    %c0_i32_1 = arith.constant 0 : i32
    %c0_i32_2 = arith.constant 0 : i32
    return %arg0, %c0_i32, %c0_i32_0, %c0_i32_1 : i32, i32, i32, i32
  }
  func.func @transform_1(%arg0: i32, %arg1: i32) -> (i32, i32, i32, i32) {
    %c0_i32 = arith.constant 0 : i32
    %c0_i32_0 = arith.constant 0 : i32
    %c0_i32_1 = arith.constant 0 : i32
    %c0_i32_2 = arith.constant 0 : i32
    %c0_i32_3 = arith.constant 0 : i32
    return %c0_i32, %c0_i32_0, %c0_i32_1, %c0_i32_2 : i32, i32, i32, i32
  }
  func.func @transform_2(%arg0: i32, %arg1: i32) -> (i32, i32) {
    %c0_i32 = arith.constant 0 : i32
    %c0_i32_0 = arith.constant 0 : i32
    %c0_i32_1 = arith.constant 0 : i32
    return %c0_i32, %c0_i32_0 : i32, i32
  }
  func.func @transform_3(%arg0: i32, %arg1: i32) -> (i32, i32, i32, i32) {
    %c0_i32 = arith.constant 0 : i32
    %c0_i32_0 = arith.constant 0 : i32
    %c0_i32_1 = arith.constant 0 : i32
    return %arg0, %arg1, %c0_i32, %c0_i32_0 : i32, i32, i32, i32
  }
}

</mosaic_0001>

<llo_original>
// kernel: tpu_custom_call.1
$region0: #{tpu_custom_call.1}
  #allocation0 [shape = 'u32[]', space=smem, size = 0x4, offset = 0x4, fixed_abs, tag = 'smem constant byte address 0x4 - core index']
  #allocation1 [shape = 'u32[144,128]{1,0:T(1,128)}', space=vmem, size = 0x12000, scoped, tag = 'internal scratch']
  %s0 = inlined_call_operand.vmem [shape: f32[2,18,18,128], index: 0, kind: input, shape index: {}]
  %s1 = inlined_call_operand.vmem [shape: f32[3,3,128,128], index: 1, kind: input, shape index: {}]
  %s2 = inlined_call_operand.vmem [shape: f32[1,128], index: 2, kind: input, shape index: {}]
  %s3 = inlined_call_operand.hbm [shape: f32[2,16,16,128], index: 3, kind: output, shape index: {}]
  %s4 = sld [smem:[#allocation0]]
  $region45: #{tpu_custom_call.1} parent=0
    _
  %s6 = ssub.s32 1, %s4
  %s7 = scalar_select 0, %s6, %s4
  $region1: #{tpu_custom_call.1} parent=0
    #allocation2 [shape = 'u8[131072]{0}', space=vmem, size = 0x20000, scoped, tag = 'output window, operand 0']
    #allocation3 [shape = 's32[2]{0}', space=sflag, size = 0x8, scoped, tag = 'scoped memory for tpu_custom_call.1']
    %8 = vsyncpa [#allocation3], 0
    %s9 = scalar_lea.sflag [#allocation3], 1
    %10 = vsyncpa %s9, 0
    loop: start=0, step=1, limit=6
    $region2: #{tpu_custom_call.1} parent=1 // loop_pre_header
      _
    $region3: #{tpu_custom_call.1} parent=1 // loop_header
      %s12 = sphi 0, %s16
      %p13 = scmp.ge.s32.totalorder %s12, 6
      %s19 = sphi 0, %s31
      %s20 = sphi 0, %s27
      %s21 = sphi 0, %s19
      %s22 = sphi 0, %s20
      %s23 = sphi 0, %s21
      %s24 = sphi 0, %s22
      %s34 = sphi 0, %s36
      %s37 = sphi 0, %s34
      %s38 = sphi 0, %s37
      %s54 = sphi 0, %s38
      %s58 = sphi 0, %s58
      %s60 = sphi 0, %s58
      %s61 = sphi 0, %s60
      %s75 = sphi 0, %s61
      %s79 = sphi 0, %s79
      %s81 = sphi 0, %s79
      %s82 = sphi 0, %s81
      %s96 = sphi 0, %s82
      %s104 = sphi 0, %s106
      %s107 = sphi 0, %s104
      %s108 = sphi 0, %s107
      %s124 = sphi 0, %s108
    $region4: #{tpu_custom_call.1} parent=1 // loop_header_branch
      %15 = sbr.rel (%p13) target = $region8
    $region5: #{tpu_custom_call.1} parent=1 // loop_body
      %s17 = ssub.s32 %s12, 1
      %s18 = ssub.s32 %s12, 2
      %s25 = sadd.s32 1, %s20
      %p26 = scmp.ge.s32.totalorder %s25, 2
      %s27 = scalar_select %p26, 0, %s25
      %s28 = sadd.s32 1, %s19
      %s29 = scalar_select %p26, %s28, %s19
      %p30 = scmp.ge.s32.totalorder %s29, 2
      %s31 = scalar_select %p30, 0, %s29
      %s32 = ssub.s32 %s19, %s31
      %p33 = scmp.eq.s32.totalorder %s32, 0
      %s35 = sadd.s32 %s34, 1
      %s36 = scalar_select %p33, %s34, %s35
      %p39 = pneg %p33
      %p40 = scmp.eq.s32.totalorder %s12, 3
      %p41 = por %p39, %p40
      %p42 = scmp.ne.s32.totalorder %s34, %s37
      %p43 = scmp.eq.s32.totalorder %s12, 0
      %p44 = por %p42, %p43
      %p45 = scmp.ne.s32.totalorder %s34, %s37
      %p46 = scmp.eq.s32.totalorder %s17, 3
      %p47 = por %p45, %p46
      %p48 = scmp.ne.s32.totalorder %s37, %s38
      %p49 = scmp.eq.s32.totalorder %s17, 0
      %p50 = por %p48, %p49
      %p51 = scmp.ne.s32.totalorder %s37, %s38
      %p52 = scmp.eq.s32.totalorder %s18, 3
      %p53 = por %p51, %p52
      %p55 = scmp.ne.s32.totalorder %s38, %s54
      %p56 = scmp.eq.s32.totalorder %s18, 0
      %p57 = por %p55, %p56
      %s59 = sadd.s32 %s58, 1
      %p62 = scmp.eq.s32.totalorder %s12, 3
      %p63 = scmp.ne.s32.totalorder %s58, %s60
      %p64 = scmp.eq.s32.totalorder %s12, 0
      %p65 = por %p63, %p64
      %p66 = scmp.ne.s32.totalorder %s58, %s60
      %p67 = scmp.eq.s32.totalorder %s17, 3
      %p68 = por %p66, %p67
      %p69 = scmp.ne.s32.totalorder %s60, %s61
      %p70 = scmp.eq.s32.totalorder %s17, 0
      %p71 = por %p69, %p70
      %p72 = scmp.ne.s32.totalorder %s60, %s61
      %p73 = scmp.eq.s32.totalorder %s18, 3
      %p74 = por %p72, %p73
      %p76 = scmp.ne.s32.totalorder %s61, %s75
      %p77 = scmp.eq.s32.totalorder %s18, 0
      %p78 = por %p76, %p77
      %s80 = sadd.s32 %s79, 1
      %p83 = scmp.eq.s32.totalorder %s12, 3
      %p84 = scmp.ne.s32.totalorder %s79, %s81
      %p85 = scmp.eq.s32.totalorder %s12, 0
      %p86 = por %p84, %p85
      %p87 = scmp.ne.s32.totalorder %s79, %s81
      %p88 = scmp.eq.s32.totalorder %s17, 3
      %p89 = por %p87, %p88
      %p90 = scmp.ne.s32.totalorder %s81, %s82
      %p91 = scmp.eq.s32.totalorder %s17, 0
      %p92 = por %p90, %p91
      %p93 = scmp.ne.s32.totalorder %s81, %s82
      %p94 = scmp.eq.s32.totalorder %s18, 3
      %p95 = por %p93, %p94
      %p97 = scmp.ne.s32.totalorder %s82, %s96
      %p98 = scmp.eq.s32.totalorder %s18, 0
      %p99 = por %p97, %p98
      %s100 = ssub.s32 %s19, %s31
      %s101 = ssub.s32 %s20, %s27
      %s102 = sor.u32 %s100, %s101
      %p103 = scmp.eq.s32.totalorder %s102, 0
      %s105 = sadd.s32 %s104, 1
      %s106 = scalar_select %p103, %s104, %s105
      %p109 = pneg %p103
      %p110 = scmp.eq.s32.totalorder %s12, 3
      %p111 = por %p109, %p110
      %p112 = scmp.ne.s32.totalorder %s104, %s107
      %p113 = scmp.eq.s32.totalorder %s12, 0
      %p114 = por %p112, %p113
      %p115 = scmp.ne.s32.totalorder %s104, %s107
      %p116 = scmp.eq.s32.totalorder %s17, 3
      %p117 = por %p115, %p116
      %p118 = scmp.ne.s32.totalorder %s107, %s108
      %p119 = scmp.eq.s32.totalorder %s17, 0
      %p120 = por %p118, %p119
      %p121 = scmp.ne.s32.totalorder %s107, %s108
      %p122 = scmp.eq.s32.totalorder %s18, 3
      %p123 = por %p121, %p122
      %p125 = scmp.ne.s32.totalorder %s108, %s124
      %p126 = scmp.eq.s32.totalorder %s18, 0
      %p127 = por %p125, %p126
      %p128 = scmp.le.s32.totalorder 1, %s12
      %p129 = scmp.lt.s32.totalorder %s12, 5
      %p130 = pnand %p128, %p129
      %p131 = pneg %p130
      // Predicated region
      $region9: #{tpu_custom_call.1} parent=5 // pred_check
        _
      $region10: #{tpu_custom_call.1} parent=5 // pred_check_branch
        %133 = sbr.rel (%p130) target = $region12
      $region11: #{tpu_custom_call.1} parent=5 // pred_region
        %s134 = ssub.s32 %s12, 1
        // Predicated region
        $region13: #{tpu_custom_call.1} parent=11 // pred_check
          %p135 = pneg %p71
        $region14: #{tpu_custom_call.1} parent=11 // pred_check_branch
          %137 = sbr.rel (%p135) target = $region16
        $region15: #{tpu_custom_call.1} parent=11 // pred_region
          _
        $region16: #{tpu_custom_call.1} parent=11 // pred_fallthru
          _
        // Predicated region
        $region17: #{tpu_custom_call.1} parent=11 // pred_check
          %p138 = pneg %p92
        $region18: #{tpu_custom_call.1} parent=11 // pred_check_branch
          %140 = sbr.rel (%p138) target = $region20
        $region19: #{tpu_custom_call.1} parent=11 // pred_region
          _
        $region20: #{tpu_custom_call.1} parent=11 // pred_fallthru
          _
      $region12: #{tpu_custom_call.1} parent=5 // pred_fallthru
        _
      %p141 = scmp.lt.s32.totalorder %s12, 4
      // Predicated region
      $region21: #{tpu_custom_call.1} parent=5 // pred_check
        %p142 = pneg %p141
      $region22: #{tpu_custom_call.1} parent=5 // pred_check_branch
        %144 = sbr.rel (%p142) target = $region24
      $region23: #{tpu_custom_call.1} parent=5 // pred_region
        // Predicated region
        $region25: #{tpu_custom_call.1} parent=23 // pred_check
          %p145 = pneg %p44
        $region26: #{tpu_custom_call.1} parent=23 // pred_check_branch
          %147 = sbr.rel (%p145) target = $region28
        $region27: #{tpu_custom_call.1} parent=23 // pred_region
          %p148 = scmp.lt.s32.totalorder %s19, 1
          %s149 = scalar_select %p148, %s19, 1
          %s150 = smul.addr %s149, 54
          %s151 = smul.addr %s150, 8
          %s152 = scalar_lea.vmem %s0, %s151
        $region28: #{tpu_custom_call.1} parent=23 // pred_fallthru
          _
      $region24: #{tpu_custom_call.1} parent=5 // pred_fallthru
        _
      %p153 = scmp.le.s32.totalorder 1, %s12
      %p154 = scmp.lt.s32.totalorder %s12, 5
      %p155 = pnand %p153, %p154
      %p156 = pneg %p155
      // Predicated region
      $region29: #{tpu_custom_call.1} parent=5 // pred_check
        _
      $region30: #{tpu_custom_call.1} parent=5 // pred_check_branch
        %158 = sbr.rel (%p155) target = $region32
      $region31: #{tpu_custom_call.1} parent=5 // pred_region
        %s159 = ssub.s32 %s12, 1
        %p160 = scmp.lt.s32.totalorder %s21, 1
        %s161 = scalar_select %p160, %s21, 1
        %s162 = smul.addr %s161, 54
        %s163 = smul.addr %s162, 8
        %s164 = scalar_lea.vmem %s0, %s163
        %p165 = pneg %p50
        %p166 = pneg %p47
        %p167 = pneg %p71
        %p168 = pneg %p68
        %p169 = pneg %p92
        %p170 = pneg %p89
        %p171 = pneg %p120
        %p172 = pneg %p117
        %s173 = sand.u32 %s107, 1
        %s174 = scalar_lea.sflag [#allocation3], %s173
        %s175 = sand.u32 %s107, 1
        %s176 = smul.addr %s175, 128
        %s177 = scalar_lea.vmem [#allocation2], %s176
        %p178 = scmp.lt.s32.totalorder %s21, 1
        %s179 = scalar_select %p178, %s21, 1
        %s180 = smul.addr %s179, 54
        %s181 = smul.addr %s180, 8
        %s182 = scalar_lea.vmem %s0, %s181
        %s183 = smul.u32 8, %s22
        %s184 = smul.u32 %s22, 8
        %s185 = smul.u32 %s184, 24
        %s186 = scalar_lea.vmem %s182, %s185
        %v187 = vld [vmem:[%s186] sm:$0xff]
        %v188 = vld [vmem:[%s186 + $0x8] sm:$0xff]
        %v189 = vld [vmem:[%s186 + $0x18] sm:$0xff]
        %v190 = vld [vmem:[%s186 + $0x20] sm:$0xff]
        %v191 = vld [vmem:[%s186 + $0x30] sm:$0xff]
        %v192 = vld [vmem:[%s186 + $0x38] sm:$0xff]
        %v193 = vld [vmem:[%s186 + $0x48] sm:$0xff]
        %v194 = vld [vmem:[%s186 + $0x50] sm:$0xff]
        %v195 = vld [vmem:[%s186 + $0x60] sm:$0xff]
        %v196 = vld [vmem:[%s186 + $0x68] sm:$0xff]
        %v197 = vld [vmem:[%s186 + $0x78] sm:$0xff]
        %v198 = vld [vmem:[%s186 + $0x80] sm:$0xff]
        %v199 = vld [vmem:[%s186 + $0x90] sm:$0xff]
        %v200 = vld [vmem:[%s186 + $0x98] sm:$0xff]
        %v201 = vld [vmem:[%s186 + $0xa8] sm:$0xff]
        %v202 = vld [vmem:[%s186 + $0xb0] sm:$0xff]
        %v203 = vld [vmem:[%s1] sm:$0xff]
        %v204 = vld [vmem:[%s1 + $0x8] sm:$0xff]
        %v205 = vld [vmem:[%s1 + $0x10] sm:$0xff]
        %v206 = vld [vmem:[%s1 + $0x18] sm:$0xff]
        %v207 = vld [vmem:[%s1 + $0x20] sm:$0xff]
        %v208 = vld [vmem:[%s1 + $0x28] sm:$0xff]
        %v209 = vld [vmem:[%s1 + $0x30] sm:$0xff]
        %v210 = vld [vmem:[%s1 + $0x38] sm:$0xff]
        %v211 = vld [vmem:[%s1 + $0x40] sm:$0xff]
        %v212 = vld [vmem:[%s1 + $0x48] sm:$0xff]
        %v213 = vld [vmem:[%s1 + $0x50] sm:$0xff]
        %v214 = vld [vmem:[%s1 + $0x58] sm:$0xff]
        %v215 = vld [vmem:[%s1 + $0x60] sm:$0xff]
        %v216 = vld [vmem:[%s1 + $0x68] sm:$0xff]
        %v217 = vld [vmem:[%s1 + $0x70] sm:$0xff]
        %v218 = vld [vmem:[%s1 + $0x78] sm:$0xff]
        %v219 = vld [vmem:[%s186 + $0x1] sm:$0xff]
        %v220 = vld [vmem:[%s186 + $0x9] sm:$0xff]
        %v221 = vld [vmem:[%s186 + $0x19] sm:$0xff]
        %v222 = vld [vmem:[%s186 + $0x21] sm:$0xff]
        %v223 = vld [vmem:[%s186 + $0x31] sm:$0xff]
        %v224 = vld [vmem:[%s186 + $0x39] sm:$0xff]
        %v225 = vld [vmem:[%s186 + $0x49] sm:$0xff]
        %v226 = vld [vmem:[%s186 + $0x51] sm:$0xff]
        %v227 = vld [vmem:[%s186 + $0x61] sm:$0xff]
        %v228 = vld [vmem:[%s186 + $0x69] sm:$0xff]
        %v229 = vld [vmem:[%s186 + $0x79] sm:$0xff]
        %v230 = vld [vmem:[%s186 + $0x81] sm:$0xff]
        %v231 = vld [vmem:[%s186 + $0x91] sm:$0xff]
        %v232 = vld [vmem:[%s186 + $0x99] sm:$0xff]
        %v233 = vld [vmem:[%s186 + $0xa9] sm:$0xff]
        %v234 = vld [vmem:[%s186 + $0xb1] sm:$0xff]
        %s235 = scalar_lea.vmem %s1, 128
        %v236 = vld [vmem:[%s235] sm:$0xff]
        %v237 = vld [vmem:[%s235 + $0x8] sm:$0xff]
        %v238 = vld [vmem:[%s235 + $0x10] sm:$0xff]
        %v239 = vld [vmem:[%s235 + $0x18] sm:$0xff]
        %v240 = vld [vmem:[%s235 + $0x20] sm:$0xff]
        %v241 = vld [vmem:[%s235 + $0x28] sm:$0xff]
        %v242 = vld [vmem:[%s235 + $0x30] sm:$0xff]
        %v243 = vld [vmem:[%s235 + $0x38] sm:$0xff]
        %v244 = vld [vmem:[%s235 + $0x40] sm:$0xff]
        %v245 = vld [vmem:[%s235 + $0x48] sm:$0xff]
        %v246 = vld [vmem:[%s235 + $0x50] sm:$0xff]
        %v247 = vld [vmem:[%s235 + $0x58] sm:$0xff]
        %v248 = vld [vmem:[%s235 + $0x60] sm:$0xff]
        %v249 = vld [vmem:[%s235 + $0x68] sm:$0xff]
        %v250 = vld [vmem:[%s235 + $0x70] sm:$0xff]
        %v251 = vld [vmem:[%s235 + $0x78] sm:$0xff]
        %252 = vmatprep.subr.mxu0 0.0
        %253 = vmatpush1.msra.mxu0 %v251
        %254 = vmatprep.subr.mxu0 0.0
        %255 = vmatpush1.msra.mxu0 %v250
        %256 = vmatprep.subr.mxu0 0.0
        %257 = vmatpush1.msra.mxu0 %v249
        %258 = vmatprep.subr.mxu0 0.0
        %259 = vmatpush1.msra.mxu0 %v248
        %260 = vmatprep.subr.mxu0 0.0
        %261 = vmatpush1.msra.mxu0 %v247
        %262 = vmatprep.subr.mxu0 0.0
        %263 = vmatpush1.msra.mxu0 %v246
        %264 = vmatprep.subr.mxu0 0.0
        %265 = vmatpush1.msra.mxu0 %v245
        %266 = vmatprep.subr.mxu0 0.0
        %267 = vmatpush1.msra.mxu0 %v244
        %268 = vmatprep.subr.mxu0 0.0
        %269 = vmatpush1.msra.mxu0 %v243
        %270 = vmatprep.subr.mxu0 0.0
        %271 = vmatpush1.msra.mxu0 %v242
        %272 = vmatprep.subr.mxu0 0.0
        %273 = vmatpush1.msra.mxu0 %v241
        %274 = vmatprep.subr.mxu0 0.0
        %275 = vmatpush1.msra.mxu0 %v240
        %276 = vmatprep.subr.mxu0 0.0
        %277 = vmatpush1.msra.mxu0 %v239
        %278 = vmatprep.subr.mxu0 0.0
        %279 = vmatpush1.msra.mxu0 %v238
        %280 = vmatprep.subr.mxu0 0.0
        %281 = vmatpush1.msra.mxu0 %v237
        %282 = vmatprep.subr.mxu0 0.0
        %283 = vmatpush1.msra.mxu0 %v236
        %284 = vmatprep.subr.mxu0 0.0
        %285 = vmatpush2.msra.mxu0 0.0
        %286 = vmatprep.subr.mxu0 0.0
        %287 = vmatpush2.msra.mxu0 0.0
        %288 = vmatprep.subr.mxu0 0.0
        %289 = vmatpush2.msra.mxu0 0.0
        %290 = vmatprep.subr.mxu0 0.0
        %291 = vmatpush2.msra.mxu0 0.0
        %292 = vmatprep.subr.mxu0 0.0
        %293 = vmatpush2.msra.mxu0 0.0
        %294 = vmatprep.subr.mxu0 0.0
        %295 = vmatpush2.msra.mxu0 0.0
        %296 = vmatprep.subr.mxu0 0.0
        %297 = vmatpush2.msra.mxu0 0.0
        %298 = vmatprep.subr.mxu0 0.0
        %299 = vmatpush2.msra.mxu0 0.0
        %300 = vmatprep.subr.mxu0 0.0
        %301 = vmatpush2.msra.mxu0 0.0
        %302 = vmatprep.subr.mxu0 0.0
        %303 = vmatpush2.msra.mxu0 0.0
        %304 = vmatprep.subr.mxu0 0.0
        %305 = vmatpush2.msra.mxu0 0.0
        %306 = vmatprep.subr.mxu0 0.0
        %307 = vmatpush2.msra.mxu0 0.0
        %308 = vmatprep.subr.mxu0 0.0
        %309 = vmatpush2.msra.mxu0 0.0
        %310 = vmatprep.subr.mxu0 0.0
        %311 = vmatpush2.msra.mxu0 0.0
        %312 = vmatprep.subr.mxu0 0.0
        %313 = vmatpush2.msra.mxu0 0.0
        %314 = vmatprep.subr.mxu0 0.0
        %315 = vmatpush2.msra.mxu0 0.0
        %316 = vmatprep.mubr.f32.mxu0 0.0
        %317 = vmatmul.mubr.f32.gmra.mxu0 %v219
        %v318 = vpop.f32.mrf.mxu0
        %v319 = vadd.f32 0.0, %v318
        %v320 = vpop.f32.mrf.mxu0
        %321 = vmatprep.mubr.f32.mxu0 0.0
        %322 = vmatmul.mubr.f32.gmra.mxu0 %v220
        %v323 = vpop.f32.mrf.mxu0
        %v324 = vadd.f32 0.0, %v323
        %v325 = vpop.f32.mrf.mxu0
        %326 = vmatprep.mubr.f32.mxu0 0.0
        %327 = vmatmul.mubr.f32.gmra.mxu0 %v221
        %v328 = vpop.f32.mrf.mxu0
        %v329 = vadd.f32 0.0, %v328
        %v330 = vpop.f32.mrf.mxu0
        %331 = vmatprep.mubr.f32.mxu0 0.0
        %332 = vmatmul.mubr.f32.gmra.mxu0 %v222
        %v333 = vpop.f32.mrf.mxu0
        %v334 = vadd.f32 0.0, %v333
        %v335 = vpop.f32.mrf.mxu0
        %336 = vmatprep.mubr.f32.mxu0 0.0
        %337 = vmatmul.mubr.f32.gmra.mxu0 %v223
        %v338 = vpop.f32.mrf.mxu0
        %v339 = vadd.f32 0.0, %v338
        %v340 = vpop.f32.mrf.mxu0
        %341 = vmatprep.mubr.f32.mxu0 0.0
        %342 = vmatmul.mubr.f32.gmra.mxu0 %v224
        %v343 = vpop.f32.mrf.mxu0
        %v344 = vadd.f32 0.0, %v343
        %v345 = vpop.f32.mrf.mxu0
        %346 = vmatprep.mubr.f32.mxu0 0.0
        %347 = vmatmul.mubr.f32.gmra.mxu0 %v225
        %v348 = vpop.f32.mrf.mxu0
        %v349 = vadd.f32 0.0, %v348
        %v350 = vpop.f32.mrf.mxu0
        %351 = vmatprep.mubr.f32.mxu0 0.0
        %352 = vmatmul.mubr.f32.gmra.mxu0 %v226
        %v353 = vpop.f32.mrf.mxu0
        %v354 = vadd.f32 0.0, %v353
        %v355 = vpop.f32.mrf.mxu0
        %356 = vmatprep.mubr.f32.mxu0 0.0
        %357 = vmatmul.mubr.f32.gmra.mxu0 %v227
        %v358 = vpop.f32.mrf.mxu0
        %v359 = vadd.f32 0.0, %v358
        %v360 = vpop.f32.mrf.mxu0
        %361 = vmatprep.mubr.f32.mxu0 0.0
        %362 = vmatmul.mubr.f32.gmra.mxu0 %v228
        %v363 = vpop.f32.mrf.mxu0
        %v364 = vadd.f32 0.0, %v363
        %v365 = vpop.f32.mrf.mxu0
        %366 = vmatprep.mubr.f32.mxu0 0.0
        %367 = vmatmul.mubr.f32.gmra.mxu0 %v229
        %v368 = vpop.f32.mrf.mxu0
        %v369 = vadd.f32 0.0, %v368
        %v370 = vpop.f32.mrf.mxu0
        %371 = vmatprep.mubr.f32.mxu0 0.0
        %372 = vmatmul.mubr.f32.gmra.mxu0 %v230
        %v373 = vpop.f32.mrf.mxu0
        %v374 = vadd.f32 0.0, %v373
        %v375 = vpop.f32.mrf.mxu0
        %376 = vmatprep.mubr.f32.mxu0 0.0
        %377 = vmatmul.mubr.f32.gmra.mxu0 %v231
        %v378 = vpop.f32.mrf.mxu0
        %v379 = vadd.f32 0.0, %v378
        %v380 = vpop.f32.mrf.mxu0
        %381 = vmatprep.mubr.f32.mxu0 0.0
        %382 = vmatmul.mubr.f32.gmra.mxu0 %v232
        %v383 = vpop.f32.mrf.mxu0
        %v384 = vadd.f32 0.0, %v383
        %v385 = vpop.f32.mrf.mxu0
        %386 = vmatprep.mubr.f32.mxu0 0.0
        %387 = vmatmul.mubr.f32.gmra.mxu0 %v233
        %v388 = vpop.f32.mrf.mxu0
        %v389 = vadd.f32 0.0, %v388
        %v390 = vpop.f32.mrf.mxu0
        %391 = vmatprep.mubr.f32.mxu0 0.0
        %392 = vmatmul.mubr.f32.gmra.mxu0 %v234
        %v393 = vpop.f32.mrf.mxu0
        %v394 = vadd.f32 0.0, %v393
        %v395 = vpop.f32.mrf.mxu0
        %396 = vdwg.mxu0
        %397 = vmatprep.subr.mxu0 0.0
        %398 = vmatpush1.msra.mxu0 %v218
        %399 = vmatprep.subr.mxu0 0.0
        %400 = vmatpush1.msra.mxu0 %v217
        %401 = vmatprep.subr.mxu0 0.0
        %402 = vmatpush1.msra.mxu0 %v216
        %403 = vmatprep.subr.mxu0 0.0
        %404 = vmatpush1.msra.mxu0 %v215
        %405 = vmatprep.subr.mxu0 0.0
        %406 = vmatpush1.msra.mxu0 %v214
        %407 = vmatprep.subr.mxu0 0.0
        %408 = vmatpush1.msra.mxu0 %v213
        %409 = vmatprep.subr.mxu0 0.0
        %410 = vmatpush1.msra.mxu0 %v212
        %411 = vmatprep.subr.mxu0 0.0
        %412 = vmatpush1.msra.mxu0 %v211
        %413 = vmatprep.subr.mxu0 0.0
        %414 = vmatpush1.msra.mxu0 %v210
        %415 = vmatprep.subr.mxu0 0.0
        %416 = vmatpush1.msra.mxu0 %v209
        %417 = vmatprep.subr.mxu0 0.0
        %418 = vmatpush1.msra.mxu0 %v208
        %419 = vmatprep.subr.mxu0 0.0
        %420 = vmatpush1.msra.mxu0 %v207
        %421 = vmatprep.subr.mxu0 0.0
        %422 = vmatpush1.msra.mxu0 %v206
        %423 = vmatprep.subr.mxu0 0.0
        %424 = vmatpush1.msra.mxu0 %v205
        %425 = vmatprep.subr.mxu0 0.0
        %426 = vmatpush1.msra.mxu0 %v204
        %427 = vmatprep.subr.mxu0 0.0
        %428 = vmatpush1.msra.mxu0 %v203
        %429 = vmatprep.subr.mxu0 0.0
        %430 = vmatpush2.msra.mxu0 0.0
        %431 = vmatprep.subr.mxu0 0.0
        %432 = vmatpush2.msra.mxu0 0.0
        %433 = vmatprep.subr.mxu0 0.0
        %434 = vmatpush2.msra.mxu0 0.0
        %435 = vmatprep.subr.mxu0 0.0
        %436 = vmatpush2.msra.mxu0 0.0
        %437 = vmatprep.subr.mxu0 0.0
        %438 = vmatpush2.msra.mxu0 0.0
        %439 = vmatprep.subr.mxu0 0.0
        %440 = vmatpush2.msra.mxu0 0.0
        %441 = vmatprep.subr.mxu0 0.0
        %442 = vmatpush2.msra.mxu0 0.0
        %443 = vmatprep.subr.mxu0 0.0
        %444 = vmatpush2.msra.mxu0 0.0
        %445 = vmatprep.subr.mxu0 0.0
        %446 = vmatpush2.msra.mxu0 0.0
        %447 = vmatprep.subr.mxu0 0.0
        %448 = vmatpush2.msra.mxu0 0.0
        %449 = vmatprep.subr.mxu0 0.0
        %450 = vmatpush2.msra.mxu0 0.0
        %451 = vmatprep.subr.mxu0 0.0
        %452 = vmatpush2.msra.mxu0 0.0
        %453 = vmatprep.subr.mxu0 0.0
        %454 = vmatpush2.msra.mxu0 0.0
        %455 = vmatprep.subr.mxu0 0.0
        %456 = vmatpush2.msra.mxu0 0.0
        %457 = vmatprep.subr.mxu0 0.0
        %458 = vmatpush2.msra.mxu0 0.0
        %459 = vmatprep.subr.mxu0 0.0
        %460 = vmatpush2.msra.mxu0 0.0
        %461 = vmatprep.mubr.f32.mxu0 0.0
        %462 = vmatmul.mubr.f32.gmra.mxu0 %v187
        %v463 = vpop.f32.mrf.mxu0
        %v464 = vadd.f32 %v319, %v463
        %v465 = vpop.f32.mrf.mxu0
        %466 = vmatprep.mubr.f32.mxu0 0.0
        %467 = vmatmul.mubr.f32.gmra.mxu0 %v188
        %v468 = vpop.f32.mrf.mxu0
        %v469 = vadd.f32 %v324, %v468
        %v470 = vpop.f32.mrf.mxu0
        %471 = vmatprep.mubr.f32.mxu0 0.0
        %472 = vmatmul.mubr.f32.gmra.mxu0 %v189
        %v473 = vpop.f32.mrf.mxu0
        %v474 = vadd.f32 %v329, %v473
        %v475 = vpop.f32.mrf.mxu0
        %476 = vmatprep.mubr.f32.mxu0 0.0
        %477 = vmatmul.mubr.f32.gmra.mxu0 %v190
        %v478 = vpop.f32.mrf.mxu0
        %v479 = vadd.f32 %v334, %v478
        %v480 = vpop.f32.mrf.mxu0
        %481 = vmatprep.mubr.f32.mxu0 0.0
        %482 = vmatmul.mubr.f32.gmra.mxu0 %v191
        %v483 = vpop.f32.mrf.mxu0
        %v484 = vadd.f32 %v339, %v483
        %v485 = vpop.f32.mrf.mxu0
        %486 = vmatprep.mubr.f32.mxu0 0.0
        %487 = vmatmul.mubr.f32.gmra.mxu0 %v192
        %v488 = vpop.f32.mrf.mxu0
        %v489 = vadd.f32 %v344, %v488
        %v490 = vpop.f32.mrf.mxu0
        %491 = vmatprep.mubr.f32.mxu0 0.0
        %492 = vmatmul.mubr.f32.gmra.mxu0 %v193
        %v493 = vpop.f32.mrf.mxu0
        %v494 = vadd.f32 %v349, %v493
        %v495 = vpop.f32.mrf.mxu0
        %496 = vmatprep.mubr.f32.mxu0 0.0
        %497 = vmatmul.mubr.f32.gmra.mxu0 %v194
        %v498 = vpop.f32.mrf.mxu0
        %v499 = vadd.f32 %v354, %v498
        %v500 = vpop.f32.mrf.mxu0
        %501 = vmatprep.mubr.f32.mxu0 0.0
        %502 = vmatmul.mubr.f32.gmra.mxu0 %v195
        %v503 = vpop.f32.mrf.mxu0
        %v504 = vadd.f32 %v359, %v503
        %v505 = vpop.f32.mrf.mxu0
        %506 = vmatprep.mubr.f32.mxu0 0.0
        %507 = vmatmul.mubr.f32.gmra.mxu0 %v196
        %v508 = vpop.f32.mrf.mxu0
        %v509 = vadd.f32 %v364, %v508
        %v510 = vpop.f32.mrf.mxu0
        %511 = vmatprep.mubr.f32.mxu0 0.0
        %512 = vmatmul.mubr.f32.gmra.mxu0 %v197
        %v513 = vpop.f32.mrf.mxu0
        %v514 = vadd.f32 %v369, %v513
        %v515 = vpop.f32.mrf.mxu0
        %516 = vmatprep.mubr.f32.mxu0 0.0
        %517 = vmatmul.mubr.f32.gmra.mxu0 %v198
        %v518 = vpop.f32.mrf.mxu0
        %v519 = vadd.f32 %v374, %v518
        %v520 = vpop.f32.mrf.mxu0
        %521 = vmatprep.mubr.f32.mxu0 0.0
        %522 = vmatmul.mubr.f32.gmra.mxu0 %v199
        %v523 = vpop.f32.mrf.mxu0
        %v524 = vadd.f32 %v379, %v523
        %v525 = vpop.f32.mrf.mxu0
        %526 = vmatprep.mubr.f32.mxu0 0.0
        %527 = vmatmul.mubr.f32.gmra.mxu0 %v200
        %v528 = vpop.f32.mrf.mxu0
        %v529 = vadd.f32 %v384, %v528
        %v530 = vpop.f32.mrf.mxu0
        %531 = vmatprep.mubr.f32.mxu0 0.0
        %532 = vmatmul.mubr.f32.gmra.mxu0 %v201
        %v533 = vpop.f32.mrf.mxu0
        %v534 = vadd.f32 %v389, %v533
        %v535 = vpop.f32.mrf.mxu0
        %536 = vmatprep.mubr.f32.mxu0 0.0
        %537 = vmatmul.mubr.f32.gmra.mxu0 %v202
        %v538 = vpop.f32.mrf.mxu0
        %v539 = vadd.f32 %v394, %v538
        %v540 = vpop.f32.mrf.mxu0
        %541 = vdwg.mxu0
        %v542 = vld [vmem:[%s186 + $0x2] sm:$0xff]
        %v543 = vld [vmem:[%s186 + $0xa] sm:$0xff]
        %v544 = vld [vmem:[%s186 + $0x1a] sm:$0xff]
        %v545 = vld [vmem:[%s186 + $0x22] sm:$0xff]
        %v546 = vld [vmem:[%s186 + $0x32] sm:$0xff]
        %v547 = vld [vmem:[%s186 + $0x3a] sm:$0xff]
        %v548 = vld [vmem:[%s186 + $0x4a] sm:$0xff]
        %v549 = vld [vmem:[%s186 + $0x52] sm:$0xff]
        %v550 = vld [vmem:[%s186 + $0x62] sm:$0xff]
        %v551 = vld [vmem:[%s186 + $0x6a] sm:$0xff]
        %v552 = vld [vmem:[%s186 + $0x7a] sm:$0xff]
        %v553 = vld [vmem:[%s186 + $0x82] sm:$0xff]
        %v554 = vld [vmem:[%s186 + $0x92] sm:$0xff]
        %v555 = vld [vmem:[%s186 + $0x9a] sm:$0xff]
        %v556 = vld [vmem:[%s186 + $0xaa] sm:$0xff]
        %v557 = vld [vmem:[%s186 + $0xb2] sm:$0xff]
        %s558 = scalar_lea.vmem %s1, 256
        %v559 = vld [vmem:[%s558] sm:$0xff]
        %v560 = vld [vmem:[%s558 + $0x8] sm:$0xff]
        %v561 = vld [vmem:[%s558 + $0x10] sm:$0xff]
        %v562 = vld [vmem:[%s558 + $0x18] sm:$0xff]
        %v563 = vld [vmem:[%s558 + $0x20] sm:$0xff]
        %v564 = vld [vmem:[%s558 + $0x28] sm:$0xff]
        %v565 = vld [vmem:[%s558 + $0x30] sm:$0xff]
        %v566 = vld [vmem:[%s558 + $0x38] sm:$0xff]
        %v567 = vld [vmem:[%s558 + $0x40] sm:$0xff]
        %v568 = vld [vmem:[%s558 + $0x48] sm:$0xff]
        %v569 = vld [vmem:[%s558 + $0x50] sm:$0xff]
        %v570 = vld [vmem:[%s558 + $0x58] sm:$0xff]
        %v571 = vld [vmem:[%s558 + $0x60] sm:$0xff]
        %v572 = vld [vmem:[%s558 + $0x68] sm:$0xff]
        %v573 = vld [vmem:[%s558 + $0x70] sm:$0xff]
        %v574 = vld [vmem:[%s558 + $0x78] sm:$0xff]
        %575 = vmatprep.subr.mxu0 0.0
        %576 = vmatpush1.msra.mxu0 %v574
        %577 = vmatprep.subr.mxu0 0.0
        %578 = vmatpush1.msra.mxu0 %v573
        %579 = vmatprep.subr.mxu0 0.0
        %580 = vmatpush1.msra.mxu0 %v572
        %581 = vmatprep.subr.mxu0 0.0
        %582 = vmatpush1.msra.mxu0 %v571
        %583 = vmatprep.subr.mxu0 0.0
        %584 = vmatpush1.msra.mxu0 %v570
        %585 = vmatprep.subr.mxu0 0.0
        %586 = vmatpush1.msra.mxu0 %v569
        %587 = vmatprep.subr.mxu0 0.0
        %588 = vmatpush1.msra.mxu0 %v568
        %589 = vmatprep.subr.mxu0 0.0
        %590 = vmatpush1.msra.mxu0 %v567
        %591 = vmatprep.subr.mxu0 0.0
        %592 = vmatpush1.msra.mxu0 %v566
        %593 = vmatprep.subr.mxu0 0.0
        %594 = vmatpush1.msra.mxu0 %v565
        %595 = vmatprep.subr.mxu0 0.0
        %596 = vmatpush1.msra.mxu0 %v564
        %597 = vmatprep.subr.mxu0 0.0
        %598 = vmatpush1.msra.mxu0 %v563
        %599 = vmatprep.subr.mxu0 0.0
        %600 = vmatpush1.msra.mxu0 %v562
        %601 = vmatprep.subr.mxu0 0.0
        %602 = vmatpush1.msra.mxu0 %v561
        %603 = vmatprep.subr.mxu0 0.0
        %604 = vmatpush1.msra.mxu0 %v560
        %605 = vmatprep.subr.mxu0 0.0
        %606 = vmatpush1.msra.mxu0 %v559
        %607 = vmatprep.subr.mxu0 0.0
        %608 = vmatpush2.msra.mxu0 0.0
        %609 = vmatprep.subr.mxu0 0.0
        %610 = vmatpush2.msra.mxu0 0.0
        %611 = vmatprep.subr.mxu0 0.0
        %612 = vmatpush2.msra.mxu0 0.0
        %613 = vmatprep.subr.mxu0 0.0
        %614 = vmatpush2.msra.mxu0 0.0
        %615 = vmatprep.subr.mxu0 0.0
        %616 = vmatpush2.msra.mxu0 0.0
        %617 = vmatprep.subr.mxu0 0.0
        %618 = vmatpush2.msra.mxu0 0.0
        %619 = vmatprep.subr.mxu0 0.0
        %620 = vmatpush2.msra.mxu0 0.0
        %621 = vmatprep.subr.mxu0 0.0
        %622 = vmatpush2.msra.mxu0 0.0
        %623 = vmatprep.subr.mxu0 0.0
        %624 = vmatpush2.msra.mxu0 0.0
        %625 = vmatprep.subr.mxu0 0.0
        %626 = vmatpush2.msra.mxu0 0.0
        %627 = vmatprep.subr.mxu0 0.0
        %628 = vmatpush2.msra.mxu0 0.0
        %629 = vmatprep.subr.mxu0 0.0
        %630 = vmatpush2.msra.mxu0 0.0
        %631 = vmatprep.subr.mxu0 0.0
        %632 = vmatpush2.msra.mxu0 0.0
        %633 = vmatprep.subr.mxu0 0.0
        %634 = vmatpush2.msra.mxu0 0.0
        %635 = vmatprep.subr.mxu0 0.0
        %636 = vmatpush2.msra.mxu0 0.0
        %637 = vmatprep.subr.mxu0 0.0
        %638 = vmatpush2.msra.mxu0 0.0
        %639 = vmatprep.mubr.f32.mxu0 0.0
        %640 = vmatmul.mubr.f32.gmra.mxu0 %v542
        %v641 = vpop.f32.mrf.mxu0
        %v642 = vadd.f32 0.0, %v641
        %v643 = vpop.f32.mrf.mxu0
        %644 = vmatprep.mubr.f32.mxu0 0.0
        %645 = vmatmul.mubr.f32.gmra.mxu0 %v543
        %v646 = vpop.f32.mrf.mxu0
        %v647 = vadd.f32 0.0, %v646
        %v648 = vpop.f32.mrf.mxu0
        %649 = vmatprep.mubr.f32.mxu0 0.0
        %650 = vmatmul.mubr.f32.gmra.mxu0 %v544
        %v651 = vpop.f32.mrf.mxu0
        %v652 = vadd.f32 0.0, %v651
        %v653 = vpop.f32.mrf.mxu0
        %654 = vmatprep.mubr.f32.mxu0 0.0
        %655 = vmatmul.mubr.f32.gmra.mxu0 %v545
        %v656 = vpop.f32.mrf.mxu0
        %v657 = vadd.f32 0.0, %v656
        %v658 = vpop.f32.mrf.mxu0
        %659 = vmatprep.mubr.f32.mxu0 0.0
        %660 = vmatmul.mubr.f32.gmra.mxu0 %v546
        %v661 = vpop.f32.mrf.mxu0
        %v662 = vadd.f32 0.0, %v661
        %v663 = vpop.f32.mrf.mxu0
        %664 = vmatprep.mubr.f32.mxu0 0.0
        %665 = vmatmul.mubr.f32.gmra.mxu0 %v547
        %v666 = vpop.f32.mrf.mxu0
        %v667 = vadd.f32 0.0, %v666
        %v668 = vpop.f32.mrf.mxu0
        %669 = vmatprep.mubr.f32.mxu0 0.0
        %670 = vmatmul.mubr.f32.gmra.mxu0 %v548
        %v671 = vpop.f32.mrf.mxu0
        %v672 = vadd.f32 0.0, %v671
        %v673 = vpop.f32.mrf.mxu0
        %674 = vmatprep.mubr.f32.mxu0 0.0
        %675 = vmatmul.mubr.f32.gmra.mxu0 %v549
        %v676 = vpop.f32.mrf.mxu0
        %v677 = vadd.f32 0.0, %v676
        %v678 = vpop.f32.mrf.mxu0
        %679 = vmatprep.mubr.f32.mxu0 0.0
        %680 = vmatmul.mubr.f32.gmra.mxu0 %v550
        %v681 = vpop.f32.mrf.mxu0
        %v682 = vadd.f32 0.0, %v681
        %v683 = vpop.f32.mrf.mxu0
        %684 = vmatprep.mubr.f32.mxu0 0.0
        %685 = vmatmul.mubr.f32.gmra.mxu0 %v551
        %v686 = vpop.f32.mrf.mxu0
        %v687 = vadd.f32 0.0, %v686
        %v688 = vpop.f32.mrf.mxu0
        %689 = vmatprep.mubr.f32.mxu0 0.0
        %690 = vmatmul.mubr.f32.gmra.mxu0 %v552
        %v691 = vpop.f32.mrf.mxu0
        %v692 = vadd.f32 0.0, %v691
        %v693 = vpop.f32.mrf.mxu0
        %694 = vmatprep.mubr.f32.mxu0 0.0
        %695 = vmatmul.mubr.f32.gmra.mxu0 %v553
        %v696 = vpop.f32.mrf.mxu0
        %v697 = vadd.f32 0.0, %v696
        %v698 = vpop.f32.mrf.mxu0
        %699 = vmatprep.mubr.f32.mxu0 0.0
        %700 = vmatmul.mubr.f32.gmra.mxu0 %v554
        %v701 = vpop.f32.mrf.mxu0
        %v702 = vadd.f32 0.0, %v701
        %v703 = vpop.f32.mrf.mxu0
        %704 = vmatprep.mubr.f32.mxu0 0.0
        %705 = vmatmul.mubr.f32.gmra.mxu0 %v555
        %v706 = vpop.f32.mrf.mxu0
        %v707 = vadd.f32 0.0, %v706
        %v708 = vpop.f32.mrf.mxu0
        %709 = vmatprep.mubr.f32.mxu0 0.0
        %710 = vmatmul.mubr.f32.gmra.mxu0 %v556
        %v711 = vpop.f32.mrf.mxu0
        %v712 = vadd.f32 0.0, %v711
        %v713 = vpop.f32.mrf.mxu0
        %714 = vmatprep.mubr.f32.mxu0 0.0
        %715 = vmatmul.mubr.f32.gmra.mxu0 %v557
        %v716 = vpop.f32.mrf.mxu0
        %v717 = vadd.f32 0.0, %v716
        %v718 = vpop.f32.mrf.mxu0
        %719 = vdwg.mxu0
        %v720 = vadd.f32 %v464, %v642
        %v721 = vadd.f32 %v469, %v647
        %v722 = vadd.f32 %v474, %v652
        %v723 = vadd.f32 %v479, %v657
        %v724 = vadd.f32 %v484, %v662
        %v725 = vadd.f32 %v489, %v667
        %v726 = vadd.f32 %v494, %v672
        %v727 = vadd.f32 %v499, %v677
        %v728 = vadd.f32 %v504, %v682
        %v729 = vadd.f32 %v509, %v687
        %v730 = vadd.f32 %v514, %v692
        %v731 = vadd.f32 %v519, %v697
        %v732 = vadd.f32 %v524, %v702
        %v733 = vadd.f32 %v529, %v707
        %v734 = vadd.f32 %v534, %v712
        %v735 = vadd.f32 %v539, %v717
        %s736 = sadd.s32 %s184, 1
        %s737 = smul.u32 %s736, 24
        %s738 = scalar_lea.vmem %s182, %s737
        %v739 = vld [vmem:[%s738] sm:$0xff]
        %v740 = vld [vmem:[%s738 + $0x8] sm:$0xff]
        %v741 = vld [vmem:[%s738 + $0x18] sm:$0xff]
        %v742 = vld [vmem:[%s738 + $0x20] sm:$0xff]
        %v743 = vld [vmem:[%s738 + $0x30] sm:$0xff]
        %v744 = vld [vmem:[%s738 + $0x38] sm:$0xff]
        %v745 = vld [vmem:[%s738 + $0x48] sm:$0xff]
        %v746 = vld [vmem:[%s738 + $0x50] sm:$0xff]
        %v747 = vld [vmem:[%s738 + $0x60] sm:$0xff]
        %v748 = vld [vmem:[%s738 + $0x68] sm:$0xff]
        %v749 = vld [vmem:[%s738 + $0x78] sm:$0xff]
        %v750 = vld [vmem:[%s738 + $0x80] sm:$0xff]
        %v751 = vld [vmem:[%s738 + $0x90] sm:$0xff]
        %v752 = vld [vmem:[%s738 + $0x98] sm:$0xff]
        %v753 = vld [vmem:[%s738 + $0xa8] sm:$0xff]
        %v754 = vld [vmem:[%s738 + $0xb0] sm:$0xff]
        %s755 = scalar_lea.vmem %s1, 384
        %v756 = vld [vmem:[%s755] sm:$0xff]
        %v757 = vld [vmem:[%s755 + $0x8] sm:$0xff]
        %v758 = vld [vmem:[%s755 + $0x10] sm:$0xff]
        %v759 = vld [vmem:[%s755 + $0x18] sm:$0xff]
        %v760 = vld [vmem:[%s755 + $0x20] sm:$0xff]
        %v761 = vld [vmem:[%s755 + $0x28] sm:$0xff]
        %v762 = vld [vmem:[%s755 + $0x30] sm:$0xff]
        %v763 = vld [vmem:[%s755 + $0x38] sm:$0xff]
        %v764 = vld [vmem:[%s755 + $0x40] sm:$0xff]
        %v765 = vld [vmem:[%s755 + $0x48] sm:$0xff]
        %v766 = vld [vmem:[%s755 + $0x50] sm:$0xff]
        %v767 = vld [vmem:[%s755 + $0x58] sm:$0xff]
        %v768 = vld [vmem:[%s755 + $0x60] sm:$0xff]
        %v769 = vld [vmem:[%s755 + $0x68] sm:$0xff]
        %v770 = vld [vmem:[%s755 + $0x70] sm:$0xff]
        %v771 = vld [vmem:[%s755 + $0x78] sm:$0xff]
        %772 = vmatprep.subr.mxu0 0.0
        %773 = vmatpush1.msra.mxu0 %v771
        %774 = vmatprep.subr.mxu0 0.0
        %775 = vmatpush1.msra.mxu0 %v770
        %776 = vmatprep.subr.mxu0 0.0
        %777 = vmatpush1.msra.mxu0 %v769
        %778 = vmatprep.subr.mxu0 0.0
        %779 = vmatpush1.msra.mxu0 %v768
        %780 = vmatprep.subr.mxu0 0.0
        %781 = vmatpush1.msra.mxu0 %v767
        %782 = vmatprep.subr.mxu0 0.0
        %783 = vmatpush1.msra.mxu0 %v766
        %784 = vmatprep.subr.mxu0 0.0
        %785 = vmatpush1.msra.mxu0 %v765
        %786 = vmatprep.subr.mxu0 0.0
        %787 = vmatpush1.msra.mxu0 %v764
        %788 = vmatprep.subr.mxu0 0.0
        %789 = vmatpush1.msra.mxu0 %v763
        %790 = vmatprep.subr.mxu0 0.0
        %791 = vmatpush1.msra.mxu0 %v762
        %792 = vmatprep.subr.mxu0 0.0
        %793 = vmatpush1.msra.mxu0 %v761
        %794 = vmatprep.subr.mxu0 0.0
        %795 = vmatpush1.msra.mxu0 %v760
        %796 = vmatprep.subr.mxu0 0.0
        %797 = vmatpush1.msra.mxu0 %v759
        %798 = vmatprep.subr.mxu0 0.0
        %799 = vmatpush1.msra.mxu0 %v758
        %800 = vmatprep.subr.mxu0 0.0
        %801 = vmatpush1.msra.mxu0 %v757
        %802 = vmatprep.subr.mxu0 0.0
        %803 = vmatpush1.msra.mxu0 %v756
        %804 = vmatprep.subr.mxu0 0.0
        %805 = vmatpush2.msra.mxu0 0.0
        %806 = vmatprep.subr.mxu0 0.0
        %807 = vmatpush2.msra.mxu0 0.0
        %808 = vmatprep.subr.mxu0 0.0
        %809 = vmatpush2.msra.mxu0 0.0
        %810 = vmatprep.subr.mxu0 0.0
        %811 = vmatpush2.msra.mxu0 0.0
        %812 = vmatprep.subr.mxu0 0.0
        %813 = vmatpush2.msra.mxu0 0.0
        %814 = vmatprep.subr.mxu0 0.0
        %815 = vmatpush2.msra.mxu0 0.0
        %816 = vmatprep.subr.mxu0 0.0
        %817 = vmatpush2.msra.mxu0 0.0
        %818 = vmatprep.subr.mxu0 0.0
        %819 = vmatpush2.msra.mxu0 0.0
        %820 = vmatprep.subr.mxu0 0.0
        %821 = vmatpush2.msra.mxu0 0.0
        %822 = vmatprep.subr.mxu0 0.0
        %823 = vmatpush2.msra.mxu0 0.0
        %824 = vmatprep.subr.mxu0 0.0
        %825 = vmatpush2.msra.mxu0 0.0
        %826 = vmatprep.subr.mxu0 0.0
        %827 = vmatpush2.msra.mxu0 0.0
        %828 = vmatprep.subr.mxu0 0.0
        %829 = vmatpush2.msra.mxu0 0.0
        %830 = vmatprep.subr.mxu0 0.0
        %831 = vmatpush2.msra.mxu0 0.0
        %832 = vmatprep.subr.mxu0 0.0
        %833 = vmatpush2.msra.mxu0 0.0
        %834 = vmatprep.subr.mxu0 0.0
        %835 = vmatpush2.msra.mxu0 0.0
        %836 = vmatprep.mubr.f32.mxu0 0.0
        %837 = vmatmul.mubr.f32.gmra.mxu0 %v739
        %v838 = vpop.f32.mrf.mxu0
        %v839 = vadd.f32 0.0, %v838
        %v840 = vpop.f32.mrf.mxu0
        %841 = vmatprep.mubr.f32.mxu0 0.0
        %842 = vmatmul.mubr.f32.gmra.mxu0 %v740
        %v843 = vpop.f32.mrf.mxu0
        %v844 = vadd.f32 0.0, %v843
        %v845 = vpop.f32.mrf.mxu0
        %846 = vmatprep.mubr.f32.mxu0 0.0
        %847 = vmatmul.mubr.f32.gmra.mxu0 %v741
        %v848 = vpop.f32.mrf.mxu0
        %v849 = vadd.f32 0.0, %v848
        %v850 = vpop.f32.mrf.mxu0
        %851 = vmatprep.mubr.f32.mxu0 0.0
        %852 = vmatmul.mubr.f32.gmra.mxu0 %v742
        %v853 = vpop.f32.mrf.mxu0
        %v854 = vadd.f32 0.0, %v853
        %v855 = vpop.f32.mrf.mxu0
        %856 = vmatprep.mubr.f32.mxu0 0.0
        %857 = vmatmul.mubr.f32.gmra.mxu0 %v743
        %v858 = vpop.f32.mrf.mxu0
        %v859 = vadd.f32 0.0, %v858
        %v860 = vpop.f32.mrf.mxu0
        %861 = vmatprep.mubr.f32.mxu0 0.0
        %862 = vmatmul.mubr.f32.gmra.mxu0 %v744
        %v863 = vpop.f32.mrf.mxu0
        %v864 = vadd.f32 0.0, %v863
        %v865 = vpop.f32.mrf.mxu0
        %866 = vmatprep.mubr.f32.mxu0 0.0
        %867 = vmatmul.mubr.f32.gmra.mxu0 %v745
        %v868 = vpop.f32.mrf.mxu0
        %v869 = vadd.f32 0.0, %v868
        %v870 = vpop.f32.mrf.mxu0
        %871 = vmatprep.mubr.f32.mxu0 0.0
        %872 = vmatmul.mubr.f32.gmra.mxu0 %v746
        %v873 = vpop.f32.mrf.mxu0
        %v874 = vadd.f32 0.0, %v873
        %v875 = vpop.f32.mrf.mxu0
        %876 = vmatprep.mubr.f32.mxu0 0.0
        %877 = vmatmul.mubr.f32.gmra.mxu0 %v747
        %v878 = vpop.f32.mrf.mxu0
        %v879 = vadd.f32 0.0, %v878
        %v880 = vpop.f32.mrf.mxu0
        %881 = vmatprep.mubr.f32.mxu0 0.0
        %882 = vmatmul.mubr.f32.gmra.mxu0 %v748
        %v883 = vpop.f32.mrf.mxu0
        %v884 = vadd.f32 0.0, %v883
        %v885 = vpop.f32.mrf.mxu0
        %886 = vmatprep.mubr.f32.mxu0 0.0
        %887 = vmatmul.mubr.f32.gmra.mxu0 %v749
        %v888 = vpop.f32.mrf.mxu0
        %v889 = vadd.f32 0.0, %v888
        %v890 = vpop.f32.mrf.mxu0
        %891 = vmatprep.mubr.f32.mxu0 0.0
        %892 = vmatmul.mubr.f32.gmra.mxu0 %v750
        %v893 = vpop.f32.mrf.mxu0
        %v894 = vadd.f32 0.0, %v893
        %v895 = vpop.f32.mrf.mxu0
        %896 = vmatprep.mubr.f32.mxu0 0.0
        %897 = vmatmul.mubr.f32.gmra.mxu0 %v751
        %v898 = vpop.f32.mrf.mxu0
        %v899 = vadd.f32 0.0, %v898
        %v900 = vpop.f32.mrf.mxu0
        %901 = vmatprep.mubr.f32.mxu0 0.0
        %902 = vmatmul.mubr.f32.gmra.mxu0 %v752
        %v903 = vpop.f32.mrf.mxu0
        %v904 = vadd.f32 0.0, %v903
        %v905 = vpop.f32.mrf.mxu0
        %906 = vmatprep.mubr.f32.mxu0 0.0
        %907 = vmatmul.mubr.f32.gmra.mxu0 %v753
        %v908 = vpop.f32.mrf.mxu0
        %v909 = vadd.f32 0.0, %v908
        %v910 = vpop.f32.mrf.mxu0
        %911 = vmatprep.mubr.f32.mxu0 0.0
        %912 = vmatmul.mubr.f32.gmra.mxu0 %v754
        %v913 = vpop.f32.mrf.mxu0
        %v914 = vadd.f32 0.0, %v913
        %v915 = vpop.f32.mrf.mxu0
        %916 = vdwg.mxu0
        %v917 = vadd.f32 %v720, %v839
        %v918 = vadd.f32 %v721, %v844
        %v919 = vadd.f32 %v722, %v849
        %v920 = vadd.f32 %v723, %v854
        %v921 = vadd.f32 %v724, %v859
        %v922 = vadd.f32 %v725, %v864
        %v923 = vadd.f32 %v726, %v869
        %v924 = vadd.f32 %v727, %v874
        %v925 = vadd.f32 %v728, %v879
        %v926 = vadd.f32 %v729, %v884
        %v927 = vadd.f32 %v730, %v889
        %v928 = vadd.f32 %v731, %v894
        %v929 = vadd.f32 %v732, %v899
        %v930 = vadd.f32 %v733, %v904
        %v931 = vadd.f32 %v734, %v909
        %v932 = vadd.f32 %v735, %v914
        %v933 = vld [vmem:[%s738 + $0x1] sm:$0xff]
        %v934 = vld [vmem:[%s738 + $0x9] sm:$0xff]
        %v935 = vld [vmem:[%s738 + $0x19] sm:$0xff]
        %v936 = vld [vmem:[%s738 + $0x21] sm:$0xff]
        %v937 = vld [vmem:[%s738 + $0x31] sm:$0xff]
        %v938 = vld [vmem:[%s738 + $0x39] sm:$0xff]
        %v939 = vld [vmem:[%s738 + $0x49] sm:$0xff]
        %v940 = vld [vmem:[%s738 + $0x51] sm:$0xff]
        %v941 = vld [vmem:[%s738 + $0x61] sm:$0xff]
        %v942 = vld [vmem:[%s738 + $0x69] sm:$0xff]
        %v943 = vld [vmem:[%s738 + $0x79] sm:$0xff]
        %v944 = vld [vmem:[%s738 + $0x81] sm:$0xff]
        %v945 = vld [vmem:[%s738 + $0x91] sm:$0xff]
        %v946 = vld [vmem:[%s738 + $0x99] sm:$0xff]
        %v947 = vld [vmem:[%s738 + $0xa9] sm:$0xff]
        %v948 = vld [vmem:[%s738 + $0xb1] sm:$0xff]
        %s949 = scalar_lea.vmem %s1, 512
        %v950 = vld [vmem:[%s949] sm:$0xff]
        %v951 = vld [vmem:[%s949 + $0x8] sm:$0xff]
        %v952 = vld [vmem:[%s949 + $0x10] sm:$0xff]
        %v953 = vld [vmem:[%s949 + $0x18] sm:$0xff]
        %v954 = vld [vmem:[%s949 + $0x20] sm:$0xff]
        %v955 = vld [vmem:[%s949 + $0x28] sm:$0xff]
        %v956 = vld [vmem:[%s949 + $0x30] sm:$0xff]
        %v957 = vld [vmem:[%s949 + $0x38] sm:$0xff]
        %v958 = vld [vmem:[%s949 + $0x40] sm:$0xff]
        %v959 = vld [vmem:[%s949 + $0x48] sm:$0xff]
        %v960 = vld [vmem:[%s949 + $0x50] sm:$0xff]
        %v961 = vld [vmem:[%s949 + $0x58] sm:$0xff]
        %v962 = vld [vmem:[%s949 + $0x60] sm:$0xff]
        %v963 = vld [vmem:[%s949 + $0x68] sm:$0xff]
        %v964 = vld [vmem:[%s949 + $0x70] sm:$0xff]
        %v965 = vld [vmem:[%s949 + $0x78] sm:$0xff]
        %966 = vmatprep.subr.mxu0 0.0
        %967 = vmatpush1.msra.mxu0 %v965
        %968 = vmatprep.subr.mxu0 0.0
        %969 = vmatpush1.msra.mxu0 %v964
        %970 = vmatprep.subr.mxu0 0.0
        %971 = vmatpush1.msra.mxu0 %v963
        %972 = vmatprep.subr.mxu0 0.0
        %973 = vmatpush1.msra.mxu0 %v962
        %974 = vmatprep.subr.mxu0 0.0
        %975 = vmatpush1.msra.mxu0 %v961
        %976 = vmatprep.subr.mxu0 0.0
        %977 = vmatpush1.msra.mxu0 %v960
        %978 = vmatprep.subr.mxu0 0.0
        %979 = vmatpush1.msra.mxu0 %v959
        %980 = vmatprep.subr.mxu0 0.0
        %981 = vmatpush1.msra.mxu0 %v958
        %982 = vmatprep.subr.mxu0 0.0
        %983 = vmatpush1.msra.mxu0 %v957
        %984 = vmatprep.subr.mxu0 0.0
        %985 = vmatpush1.msra.mxu0 %v956
        %986 = vmatprep.subr.mxu0 0.0
        %987 = vmatpush1.msra.mxu0 %v955
        %988 = vmatprep.subr.mxu0 0.0
        %989 = vmatpush1.msra.mxu0 %v954
        %990 = vmatprep.subr.mxu0 0.0
        %991 = vmatpush1.msra.mxu0 %v953
        %992 = vmatprep.subr.mxu0 0.0
        %993 = vmatpush1.msra.mxu0 %v952
        %994 = vmatprep.subr.mxu0 0.0
        %995 = vmatpush1.msra.mxu0 %v951
        %996 = vmatprep.subr.mxu0 0.0
        %997 = vmatpush1.msra.mxu0 %v950
        %998 = vmatprep.subr.mxu0 0.0
        %999 = vmatpush2.msra.mxu0 0.0
        %1000 = vmatprep.subr.mxu0 0.0
        %1001 = vmatpush2.msra.mxu0 0.0
        %1002 = vmatprep.subr.mxu0 0.0
        %1003 = vmatpush2.msra.mxu0 0.0
        %1004 = vmatprep.subr.mxu0 0.0
        %1005 = vmatpush2.msra.mxu0 0.0
        %1006 = vmatprep.subr.mxu0 0.0
        %1007 = vmatpush2.msra.mxu0 0.0
        %1008 = vmatprep.subr.mxu0 0.0
        %1009 = vmatpush2.msra.mxu0 0.0
        %1010 = vmatprep.subr.mxu0 0.0
        %1011 = vmatpush2.msra.mxu0 0.0
        %1012 = vmatprep.subr.mxu0 0.0
        %1013 = vmatpush2.msra.mxu0 0.0
        %1014 = vmatprep.subr.mxu0 0.0
        %1015 = vmatpush2.msra.mxu0 0.0
        %1016 = vmatprep.subr.mxu0 0.0
        %1017 = vmatpush2.msra.mxu0 0.0
        %1018 = vmatprep.subr.mxu0 0.0
        %1019 = vmatpush2.msra.mxu0 0.0
        %1020 = vmatprep.subr.mxu0 0.0
        %1021 = vmatpush2.msra.mxu0 0.0
        %1022 = vmatprep.subr.mxu0 0.0
        %1023 = vmatpush2.msra.mxu0 0.0
        %1024 = vmatprep.subr.mxu0 0.0
        %1025 = vmatpush2.msra.mxu0 0.0
        %1026 = vmatprep.subr.mxu0 0.0
        %1027 = vmatpush2.msra.mxu0 0.0
        %1028 = vmatprep.subr.mxu0 0.0
        %1029 = vmatpush2.msra.mxu0 0.0
        %1030 = vmatprep.mubr.f32.mxu0 0.0
        %1031 = vmatmul.mubr.f32.gmra.mxu0 %v933
        %v1032 = vpop.f32.mrf.mxu0
        %v1033 = vadd.f32 0.0, %v1032
        %v1034 = vpop.f32.mrf.mxu0
        %1035 = vmatprep.mubr.f32.mxu0 0.0
        %1036 = vmatmul.mubr.f32.gmra.mxu0 %v934
        %v1037 = vpop.f32.mrf.mxu0
        %v1038 = vadd.f32 0.0, %v1037
        %v1039 = vpop.f32.mrf.mxu0
        %1040 = vmatprep.mubr.f32.mxu0 0.0
        %1041 = vmatmul.mubr.f32.gmra.mxu0 %v935
        %v1042 = vpop.f32.mrf.mxu0
        %v1043 = vadd.f32 0.0, %v1042
        %v1044 = vpop.f32.mrf.mxu0
        %1045 = vmatprep.mubr.f32.mxu0 0.0
        %1046 = vmatmul.mubr.f32.gmra.mxu0 %v936
        %v1047 = vpop.f32.mrf.mxu0
        %v1048 = vadd.f32 0.0, %v1047
        %v1049 = vpop.f32.mrf.mxu0
        %1050 = vmatprep.mubr.f32.mxu0 0.0
        %1051 = vmatmul.mubr.f32.gmra.mxu0 %v937
        %v1052 = vpop.f32.mrf.mxu0
        %v1053 = vadd.f32 0.0, %v1052
        %v1054 = vpop.f32.mrf.mxu0
        %1055 = vmatprep.mubr.f32.mxu0 0.0
        %1056 = vmatmul.mubr.f32.gmra.mxu0 %v938
        %v1057 = vpop.f32.mrf.mxu0
        %v1058 = vadd.f32 0.0, %v1057
        %v1059 = vpop.f32.mrf.mxu0
        %1060 = vmatprep.mubr.f32.mxu0 0.0
        %1061 = vmatmul.mubr.f32.gmra.mxu0 %v939
        %v1062 = vpop.f32.mrf.mxu0
        %v1063 = vadd.f32 0.0, %v1062
        %v1064 = vpop.f32.mrf.mxu0
        %1065 = vmatprep.mubr.f32.mxu0 0.0
        %1066 = vmatmul.mubr.f32.gmra.mxu0 %v940
        %v1067 = vpop.f32.mrf.mxu0
        %v1068 = vadd.f32 0.0, %v1067
        %v1069 = vpop.f32.mrf.mxu0
        %1070 = vmatprep.mubr.f32.mxu0 0.0
        %1071 = vmatmul.mubr.f32.gmra.mxu0 %v941
        %v1072 = vpop.f32.mrf.mxu0
        %v1073 = vadd.f32 0.0, %v1072
        %v1074 = vpop.f32.mrf.mxu0
        %1075 = vmatprep.mubr.f32.mxu0 0.0
        %1076 = vmatmul.mubr.f32.gmra.mxu0 %v942
        %v1077 = vpop.f32.mrf.mxu0
        %v1078 = vadd.f32 0.0, %v1077
        %v1079 = vpop.f32.mrf.mxu0
        %1080 = vmatprep.mubr.f32.mxu0 0.0
        %1081 = vmatmul.mubr.f32.gmra.mxu0 %v943
        %v1082 = vpop.f32.mrf.mxu0
        %v1083 = vadd.f32 0.0, %v1082
        %v1084 = vpop.f32.mrf.mxu0
        %1085 = vmatprep.mubr.f32.mxu0 0.0
        %1086 = vmatmul.mubr.f32.gmra.mxu0 %v944
        %v1087 = vpop.f32.mrf.mxu0
        %v1088 = vadd.f32 0.0, %v1087
        %v1089 = vpop.f32.mrf.mxu0
        %1090 = vmatprep.mubr.f32.mxu0 0.0
        %1091 = vmatmul.mubr.f32.gmra.mxu0 %v945
        %v1092 = vpop.f32.mrf.mxu0
        %v1093 = vadd.f32 0.0, %v1092
        %v1094 = vpop.f32.mrf.mxu0
        %1095 = vmatprep.mubr.f32.mxu0 0.0
        %1096 = vmatmul.mubr.f32.gmra.mxu0 %v946
        %v1097 = vpop.f32.mrf.mxu0
        %v1098 = vadd.f32 0.0, %v1097
        %v1099 = vpop.f32.mrf.mxu0
        %1100 = vmatprep.mubr.f32.mxu0 0.0
        %1101 = vmatmul.mubr.f32.gmra.mxu0 %v947
        %v1102 = vpop.f32.mrf.mxu0
        %v1103 = vadd.f32 0.0, %v1102
        %v1104 = vpop.f32.mrf.mxu0
        %1105 = vmatprep.mubr.f32.mxu0 0.0
        %1106 = vmatmul.mubr.f32.gmra.mxu0 %v948
        %v1107 = vpop.f32.mrf.mxu0
        %v1108 = vadd.f32 0.0, %v1107
        %v1109 = vpop.f32.mrf.mxu0
        %1110 = vdwg.mxu0
        %v1111 = vadd.f32 %v917, %v1033
        %v1112 = vadd.f32 %v918, %v1038
        %v1113 = vadd.f32 %v919, %v1043
        %v1114 = vadd.f32 %v920, %v1048
        %v1115 = vadd.f32 %v921, %v1053
        %v1116 = vadd.f32 %v922, %v1058
        %v1117 = vadd.f32 %v923, %v1063
        %v1118 = vadd.f32 %v924, %v1068
        %v1119 = vadd.f32 %v925, %v1073
        %v1120 = vadd.f32 %v926, %v1078
        %v1121 = vadd.f32 %v927, %v1083
        %v1122 = vadd.f32 %v928, %v1088
        %v1123 = vadd.f32 %v929, %v1093
        %v1124 = vadd.f32 %v930, %v1098
        %v1125 = vadd.f32 %v931, %v1103
        %v1126 = vadd.f32 %v932, %v1108
        %v1127 = vld [vmem:[%s738 + $0x2] sm:$0xff]
        %v1128 = vld [vmem:[%s738 + $0xa] sm:$0xff]
        %v1129 = vld [vmem:[%s738 + $0x1a] sm:$0xff]
        %v1130 = vld [vmem:[%s738 + $0x22] sm:$0xff]
        %v1131 = vld [vmem:[%s738 + $0x32] sm:$0xff]
        %v1132 = vld [vmem:[%s738 + $0x3a] sm:$0xff]
        %v1133 = vld [vmem:[%s738 + $0x4a] sm:$0xff]
        %v1134 = vld [vmem:[%s738 + $0x52] sm:$0xff]
        %v1135 = vld [vmem:[%s738 + $0x62] sm:$0xff]
        %v1136 = vld [vmem:[%s738 + $0x6a] sm:$0xff]
        %v1137 = vld [vmem:[%s738 + $0x7a] sm:$0xff]
        %v1138 = vld [vmem:[%s738 + $0x82] sm:$0xff]
        %v1139 = vld [vmem:[%s738 + $0x92] sm:$0xff]
        %v1140 = vld [vmem:[%s738 + $0x9a] sm:$0xff]
        %v1141 = vld [vmem:[%s738 + $0xaa] sm:$0xff]
        %v1142 = vld [vmem:[%s738 + $0xb2] sm:$0xff]
        %s1143 = scalar_lea.vmem %s1, 640
        %v1144 = vld [vmem:[%s1143] sm:$0xff]
        %v1145 = vld [vmem:[%s1143 + $0x8] sm:$0xff]
        %v1146 = vld [vmem:[%s1143 + $0x10] sm:$0xff]
        %v1147 = vld [vmem:[%s1143 + $0x18] sm:$0xff]
        %v1148 = vld [vmem:[%s1143 + $0x20] sm:$0xff]
        %v1149 = vld [vmem:[%s1143 + $0x28] sm:$0xff]
        %v1150 = vld [vmem:[%s1143 + $0x30] sm:$0xff]
        %v1151 = vld [vmem:[%s1143 + $0x38] sm:$0xff]
        %v1152 = vld [vmem:[%s1143 + $0x40] sm:$0xff]
        %v1153 = vld [vmem:[%s1143 + $0x48] sm:$0xff]
        %v1154 = vld [vmem:[%s1143 + $0x50] sm:$0xff]
        %v1155 = vld [vmem:[%s1143 + $0x58] sm:$0xff]
        %v1156 = vld [vmem:[%s1143 + $0x60] sm:$0xff]
        %v1157 = vld [vmem:[%s1143 + $0x68] sm:$0xff]
        %v1158 = vld [vmem:[%s1143 + $0x70] sm:$0xff]
        %v1159 = vld [vmem:[%s1143 + $0x78] sm:$0xff]
        %1160 = vmatprep.subr.mxu0 0.0
        %1161 = vmatpush1.msra.mxu0 %v1159
        %1162 = vmatprep.subr.mxu0 0.0
        %1163 = vmatpush1.msra.mxu0 %v1158
        %1164 = vmatprep.subr.mxu0 0.0
        %1165 = vmatpush1.msra.mxu0 %v1157
        %1166 = vmatprep.subr.mxu0 0.0
        %1167 = vmatpush1.msra.mxu0 %v1156
        %1168 = vmatprep.subr.mxu0 0.0
        %1169 = vmatpush1.msra.mxu0 %v1155
        %1170 = vmatprep.subr.mxu0 0.0
        %1171 = vmatpush1.msra.mxu0 %v1154
        %1172 = vmatprep.subr.mxu0 0.0
        %1173 = vmatpush1.msra.mxu0 %v1153
        %1174 = vmatprep.subr.mxu0 0.0
        %1175 = vmatpush1.msra.mxu0 %v1152
        %1176 = vmatprep.subr.mxu0 0.0
        %1177 = vmatpush1.msra.mxu0 %v1151
        %1178 = vmatprep.subr.mxu0 0.0
        %1179 = vmatpush1.msra.mxu0 %v1150
        %1180 = vmatprep.subr.mxu0 0.0
        %1181 = vmatpush1.msra.mxu0 %v1149
        %1182 = vmatprep.subr.mxu0 0.0
        %1183 = vmatpush1.msra.mxu0 %v1148
        %1184 = vmatprep.subr.mxu0 0.0
        %1185 = vmatpush1.msra.mxu0 %v1147
        %1186 = vmatprep.subr.mxu0 0.0
        %1187 = vmatpush1.msra.mxu0 %v1146
        %1188 = vmatprep.subr.mxu0 0.0
        %1189 = vmatpush1.msra.mxu0 %v1145
        %1190 = vmatprep.subr.mxu0 0.0
        %1191 = vmatpush1.msra.mxu0 %v1144
        %1192 = vmatprep.subr.mxu0 0.0
        %1193 = vmatpush2.msra.mxu0 0.0
        %1194 = vmatprep.subr.mxu0 0.0
        %1195 = vmatpush2.msra.mxu0 0.0
        %1196 = vmatprep.subr.mxu0 0.0
        %1197 = vmatpush2.msra.mxu0 0.0
        %1198 = vmatprep.subr.mxu0 0.0
        %1199 = vmatpush2.msra.mxu0 0.0
        %1200 = vmatprep.subr.mxu0 0.0
        %1201 = vmatpush2.msra.mxu0 0.0
        %1202 = vmatprep.subr.mxu0 0.0
        %1203 = vmatpush2.msra.mxu0 0.0
        %1204 = vmatprep.subr.mxu0 0.0
        %1205 = vmatpush2.msra.mxu0 0.0
        %1206 = vmatprep.subr.mxu0 0.0
        %1207 = vmatpush2.msra.mxu0 0.0
        %1208 = vmatprep.subr.mxu0 0.0
        %1209 = vmatpush2.msra.mxu0 0.0
        %1210 = vmatprep.subr.mxu0 0.0
        %1211 = vmatpush2.msra.mxu0 0.0
        %1212 = vmatprep.subr.mxu0 0.0
        %1213 = vmatpush2.msra.mxu0 0.0
        %1214 = vmatprep.subr.mxu0 0.0
        %1215 = vmatpush2.msra.mxu0 0.0
        %1216 = vmatprep.subr.mxu0 0.0
        %1217 = vmatpush2.msra.mxu0 0.0
        %1218 = vmatprep.subr.mxu0 0.0
        %1219 = vmatpush2.msra.mxu0 0.0
        %1220 = vmatprep.subr.mxu0 0.0
        %1221 = vmatpush2.msra.mxu0 0.0
        %1222 = vmatprep.subr.mxu0 0.0
        %1223 = vmatpush2.msra.mxu0 0.0
        %1224 = vmatprep.mubr.f32.mxu0 0.0
        %1225 = vmatmul.mubr.f32.gmra.mxu0 %v1127
        %v1226 = vpop.f32.mrf.mxu0
        %v1227 = vadd.f32 0.0, %v1226
        %v1228 = vpop.f32.mrf.mxu0
        %1229 = vmatprep.mubr.f32.mxu0 0.0
        %1230 = vmatmul.mubr.f32.gmra.mxu0 %v1128
        %v1231 = vpop.f32.mrf.mxu0
        %v1232 = vadd.f32 0.0, %v1231
        %v1233 = vpop.f32.mrf.mxu0
        %1234 = vmatprep.mubr.f32.mxu0 0.0
        %1235 = vmatmul.mubr.f32.gmra.mxu0 %v1129
        %v1236 = vpop.f32.mrf.mxu0
        %v1237 = vadd.f32 0.0, %v1236
        %v1238 = vpop.f32.mrf.mxu0
        %1239 = vmatprep.mubr.f32.mxu0 0.0
        %1240 = vmatmul.mubr.f32.gmra.mxu0 %v1130
        %v1241 = vpop.f32.mrf.mxu0
        %v1242 = vadd.f32 0.0, %v1241
        %v1243 = vpop.f32.mrf.mxu0
        %1244 = vmatprep.mubr.f32.mxu0 0.0
        %1245 = vmatmul.mubr.f32.gmra.mxu0 %v1131
        %v1246 = vpop.f32.mrf.mxu0
        %v1247 = vadd.f32 0.0, %v1246
        %v1248 = vpop.f32.mrf.mxu0
        %1249 = vmatprep.mubr.f32.mxu0 0.0
        %1250 = vmatmul.mubr.f32.gmra.mxu0 %v1132
        %v1251 = vpop.f32.mrf.mxu0
        %v1252 = vadd.f32 0.0, %v1251
        %v1253 = vpop.f32.mrf.mxu0
        %1254 = vmatprep.mubr.f32.mxu0 0.0
        %1255 = vmatmul.mubr.f32.gmra.mxu0 %v1133
        %v1256 = vpop.f32.mrf.mxu0
        %v1257 = vadd.f32 0.0, %v1256
        %v1258 = vpop.f32.mrf.mxu0
        %1259 = vmatprep.mubr.f32.mxu0 0.0
        %1260 = vmatmul.mubr.f32.gmra.mxu0 %v1134
        %v1261 = vpop.f32.mrf.mxu0
        %v1262 = vadd.f32 0.0, %v1261
        %v1263 = vpop.f32.mrf.mxu0
        %1264 = vmatprep.mubr.f32.mxu0 0.0
        %1265 = vmatmul.mubr.f32.gmra.mxu0 %v1135
        %v1266 = vpop.f32.mrf.mxu0
        %v1267 = vadd.f32 0.0, %v1266
        %v1268 = vpop.f32.mrf.mxu0
        %1269 = vmatprep.mubr.f32.mxu0 0.0
        %1270 = vmatmul.mubr.f32.gmra.mxu0 %v1136
        %v1271 = vpop.f32.mrf.mxu0
        %v1272 = vadd.f32 0.0, %v1271
        %v1273 = vpop.f32.mrf.mxu0
        %1274 = vmatprep.mubr.f32.mxu0 0.0
        %1275 = vmatmul.mubr.f32.gmra.mxu0 %v1137
        %v1276 = vpop.f32.mrf.mxu0
        %v1277 = vadd.f32 0.0, %v1276
        %v1278 = vpop.f32.mrf.mxu0
        %1279 = vmatprep.mubr.f32.mxu0 0.0
        %1280 = vmatmul.mubr.f32.gmra.mxu0 %v1138
        %v1281 = vpop.f32.mrf.mxu0
        %v1282 = vadd.f32 0.0, %v1281
        %v1283 = vpop.f32.mrf.mxu0
        %1284 = vmatprep.mubr.f32.mxu0 0.0
        %1285 = vmatmul.mubr.f32.gmra.mxu0 %v1139
        %v1286 = vpop.f32.mrf.mxu0
        %v1287 = vadd.f32 0.0, %v1286
        %v1288 = vpop.f32.mrf.mxu0
        %1289 = vmatprep.mubr.f32.mxu0 0.0
        %1290 = vmatmul.mubr.f32.gmra.mxu0 %v1140
        %v1291 = vpop.f32.mrf.mxu0
        %v1292 = vadd.f32 0.0, %v1291
        %v1293 = vpop.f32.mrf.mxu0
        %1294 = vmatprep.mubr.f32.mxu0 0.0
        %1295 = vmatmul.mubr.f32.gmra.mxu0 %v1141
        %v1296 = vpop.f32.mrf.mxu0
        %v1297 = vadd.f32 0.0, %v1296
        %v1298 = vpop.f32.mrf.mxu0
        %1299 = vmatprep.mubr.f32.mxu0 0.0
        %1300 = vmatmul.mubr.f32.gmra.mxu0 %v1142
        %v1301 = vpop.f32.mrf.mxu0
        %v1302 = vadd.f32 0.0, %v1301
        %v1303 = vpop.f32.mrf.mxu0
        %1304 = vdwg.mxu0
        %v1305 = vadd.f32 %v1111, %v1227
        %v1306 = vadd.f32 %v1112, %v1232
        %v1307 = vadd.f32 %v1113, %v1237
        %v1308 = vadd.f32 %v1114, %v1242
        %v1309 = vadd.f32 %v1115, %v1247
        %v1310 = vadd.f32 %v1116, %v1252
        %v1311 = vadd.f32 %v1117, %v1257
        %v1312 = vadd.f32 %v1118, %v1262
        %v1313 = vadd.f32 %v1119, %v1267
        %v1314 = vadd.f32 %v1120, %v1272
        %v1315 = vadd.f32 %v1121, %v1277
        %v1316 = vadd.f32 %v1122, %v1282
        %v1317 = vadd.f32 %v1123, %v1287
        %v1318 = vadd.f32 %v1124, %v1292
        %v1319 = vadd.f32 %v1125, %v1297
        %v1320 = vadd.f32 %v1126, %v1302
        %s1321 = sadd.s32 %s184, 2
        %s1322 = smul.u32 %s1321, 24
        %s1323 = scalar_lea.vmem %s182, %s1322
        %v1324 = vld [vmem:[%s1323] sm:$0xff]
        %v1325 = vld [vmem:[%s1323 + $0x8] sm:$0xff]
        %v1326 = vld [vmem:[%s1323 + $0x18] sm:$0xff]
        %v1327 = vld [vmem:[%s1323 + $0x20] sm:$0xff]
        %v1328 = vld [vmem:[%s1323 + $0x30] sm:$0xff]
        %v1329 = vld [vmem:[%s1323 + $0x38] sm:$0xff]
        %v1330 = vld [vmem:[%s1323 + $0x48] sm:$0xff]
        %v1331 = vld [vmem:[%s1323 + $0x50] sm:$0xff]
        %v1332 = vld [vmem:[%s1323 + $0x60] sm:$0xff]
        %v1333 = vld [vmem:[%s1323 + $0x68] sm:$0xff]
        %v1334 = vld [vmem:[%s1323 + $0x78] sm:$0xff]
        %v1335 = vld [vmem:[%s1323 + $0x80] sm:$0xff]
        %v1336 = vld [vmem:[%s1323 + $0x90] sm:$0xff]
        %v1337 = vld [vmem:[%s1323 + $0x98] sm:$0xff]
        %v1338 = vld [vmem:[%s1323 + $0xa8] sm:$0xff]
        %v1339 = vld [vmem:[%s1323 + $0xb0] sm:$0xff]
        %s1340 = scalar_lea.vmem %s1, 768
        %v1341 = vld [vmem:[%s1340] sm:$0xff]
        %v1342 = vld [vmem:[%s1340 + $0x8] sm:$0xff]
        %v1343 = vld [vmem:[%s1340 + $0x10] sm:$0xff]
        %v1344 = vld [vmem:[%s1340 + $0x18] sm:$0xff]
        %v1345 = vld [vmem:[%s1340 + $0x20] sm:$0xff]
        %v1346 = vld [vmem:[%s1340 + $0x28] sm:$0xff]
        %v1347 = vld [vmem:[%s1340 + $0x30] sm:$0xff]
        %v1348 = vld [vmem:[%s1340 + $0x38] sm:$0xff]
        %v1349 = vld [vmem:[%s1340 + $0x40] sm:$0xff]
        %v1350 = vld [vmem:[%s1340 + $0x48] sm:$0xff]
        %v1351 = vld [vmem:[%s1340 + $0x50] sm:$0xff]
        %v1352 = vld [vmem:[%s1340 + $0x58] sm:$0xff]
        %v1353 = vld [vmem:[%s1340 + $0x60] sm:$0xff]
        %v1354 = vld [vmem:[%s1340 + $0x68] sm:$0xff]
        %v1355 = vld [vmem:[%s1340 + $0x70] sm:$0xff]
        %v1356 = vld [vmem:[%s1340 + $0x78] sm:$0xff]
        %1357 = vmatprep.subr.mxu0 0.0
        %1358 = vmatpush1.msra.mxu0 %v1356
        %1359 = vmatprep.subr.mxu0 0.0
        %1360 = vmatpush1.msra.mxu0 %v1355
        %1361 = vmatprep.subr.mxu0 0.0
        %1362 = vmatpush1.msra.mxu0 %v1354
        %1363 = vmatprep.subr.mxu0 0.0
        %1364 = vmatpush1.msra.mxu0 %v1353
        %1365 = vmatprep.subr.mxu0 0.0
        %1366 = vmatpush1.msra.mxu0 %v1352
        %1367 = vmatprep.subr.mxu0 0.0
        %1368 = vmatpush1.msra.mxu0 %v1351
        %1369 = vmatprep.subr.mxu0 0.0
        %1370 = vmatpush1.msra.mxu0 %v1350
        %1371 = vmatprep.subr.mxu0 0.0
        %1372 = vmatpush1.msra.mxu0 %v1349
        %1373 = vmatprep.subr.mxu0 0.0
        %1374 = vmatpush1.msra.mxu0 %v1348
        %1375 = vmatprep.subr.mxu0 0.0
        %1376 = vmatpush1.msra.mxu0 %v1347
        %1377 = vmatprep.subr.mxu0 0.0
        %1378 = vmatpush1.msra.mxu0 %v1346
        %1379 = vmatprep.subr.mxu0 0.0
        %1380 = vmatpush1.msra.mxu0 %v1345
        %1381 = vmatprep.subr.mxu0 0.0
        %1382 = vmatpush1.msra.mxu0 %v1344
        %1383 = vmatprep.subr.mxu0 0.0
        %1384 = vmatpush1.msra.mxu0 %v1343
        %1385 = vmatprep.subr.mxu0 0.0
        %1386 = vmatpush1.msra.mxu0 %v1342
        %1387 = vmatprep.subr.mxu0 0.0
        %1388 = vmatpush1.msra.mxu0 %v1341
        %1389 = vmatprep.subr.mxu0 0.0
        %1390 = vmatpush2.msra.mxu0 0.0
        %1391 = vmatprep.subr.mxu0 0.0
        %1392 = vmatpush2.msra.mxu0 0.0
        %1393 = vmatprep.subr.mxu0 0.0
        %1394 = vmatpush2.msra.mxu0 0.0
        %1395 = vmatprep.subr.mxu0 0.0
        %1396 = vmatpush2.msra.mxu0 0.0
        %1397 = vmatprep.subr.mxu0 0.0
        %1398 = vmatpush2.msra.mxu0 0.0
        %1399 = vmatprep.subr.mxu0 0.0
        %1400 = vmatpush2.msra.mxu0 0.0
        %1401 = vmatprep.subr.mxu0 0.0
        %1402 = vmatpush2.msra.mxu0 0.0
        %1403 = vmatprep.subr.mxu0 0.0
        %1404 = vmatpush2.msra.mxu0 0.0
        %1405 = vmatprep.subr.mxu0 0.0
        %1406 = vmatpush2.msra.mxu0 0.0
        %1407 = vmatprep.subr.mxu0 0.0
        %1408 = vmatpush2.msra.mxu0 0.0
        %1409 = vmatprep.subr.mxu0 0.0
        %1410 = vmatpush2.msra.mxu0 0.0
        %1411 = vmatprep.subr.mxu0 0.0
        %1412 = vmatpush2.msra.mxu0 0.0
        %1413 = vmatprep.subr.mxu0 0.0
        %1414 = vmatpush2.msra.mxu0 0.0
        %1415 = vmatprep.subr.mxu0 0.0
        %1416 = vmatpush2.msra.mxu0 0.0
        %1417 = vmatprep.subr.mxu0 0.0
        %1418 = vmatpush2.msra.mxu0 0.0
        %1419 = vmatprep.subr.mxu0 0.0
        %1420 = vmatpush2.msra.mxu0 0.0
        %1421 = vmatprep.mubr.f32.mxu0 0.0
        %1422 = vmatmul.mubr.f32.gmra.mxu0 %v1324
        %v1423 = vpop.f32.mrf.mxu0
        %v1424 = vadd.f32 0.0, %v1423
        %v1425 = vpop.f32.mrf.mxu0
        %1426 = vmatprep.mubr.f32.mxu0 0.0
        %1427 = vmatmul.mubr.f32.gmra.mxu0 %v1325
        %v1428 = vpop.f32.mrf.mxu0
        %v1429 = vadd.f32 0.0, %v1428
        %v1430 = vpop.f32.mrf.mxu0
        %1431 = vmatprep.mubr.f32.mxu0 0.0
        %1432 = vmatmul.mubr.f32.gmra.mxu0 %v1326
        %v1433 = vpop.f32.mrf.mxu0
        %v1434 = vadd.f32 0.0, %v1433
        %v1435 = vpop.f32.mrf.mxu0
        %1436 = vmatprep.mubr.f32.mxu0 0.0
        %1437 = vmatmul.mubr.f32.gmra.mxu0 %v1327
        %v1438 = vpop.f32.mrf.mxu0
        %v1439 = vadd.f32 0.0, %v1438
        %v1440 = vpop.f32.mrf.mxu0
        %1441 = vmatprep.mubr.f32.mxu0 0.0
        %1442 = vmatmul.mubr.f32.gmra.mxu0 %v1328
        %v1443 = vpop.f32.mrf.mxu0
        %v1444 = vadd.f32 0.0, %v1443
        %v1445 = vpop.f32.mrf.mxu0
        %1446 = vmatprep.mubr.f32.mxu0 0.0
        %1447 = vmatmul.mubr.f32.gmra.mxu0 %v1329
        %v1448 = vpop.f32.mrf.mxu0
        %v1449 = vadd.f32 0.0, %v1448
        %v1450 = vpop.f32.mrf.mxu0
        %1451 = vmatprep.mubr.f32.mxu0 0.0
        %1452 = vmatmul.mubr.f32.gmra.mxu0 %v1330
        %v1453 = vpop.f32.mrf.mxu0
        %v1454 = vadd.f32 0.0, %v1453
        %v1455 = vpop.f32.mrf.mxu0
        %1456 = vmatprep.mubr.f32.mxu0 0.0
        %1457 = vmatmul.mubr.f32.gmra.mxu0 %v1331
        %v1458 = vpop.f32.mrf.mxu0
        %v1459 = vadd.f32 0.0, %v1458
        %v1460 = vpop.f32.mrf.mxu0
        %1461 = vmatprep.mubr.f32.mxu0 0.0
        %1462 = vmatmul.mubr.f32.gmra.mxu0 %v1332
        %v1463 = vpop.f32.mrf.mxu0
        %v1464 = vadd.f32 0.0, %v1463
        %v1465 = vpop.f32.mrf.mxu0
        %1466 = vmatprep.mubr.f32.mxu0 0.0
        %1467 = vmatmul.mubr.f32.gmra.mxu0 %v1333
        %v1468 = vpop.f32.mrf.mxu0
        %v1469 = vadd.f32 0.0, %v1468
        %v1470 = vpop.f32.mrf.mxu0
        %1471 = vmatprep.mubr.f32.mxu0 0.0
        %1472 = vmatmul.mubr.f32.gmra.mxu0 %v1334
        %v1473 = vpop.f32.mrf.mxu0
        %v1474 = vadd.f32 0.0, %v1473
        %v1475 = vpop.f32.mrf.mxu0
        %1476 = vmatprep.mubr.f32.mxu0 0.0
        %1477 = vmatmul.mubr.f32.gmra.mxu0 %v1335
        %v1478 = vpop.f32.mrf.mxu0
        %v1479 = vadd.f32 0.0, %v1478
        %v1480 = vpop.f32.mrf.mxu0
        %1481 = vmatprep.mubr.f32.mxu0 0.0
        %1482 = vmatmul.mubr.f32.gmra.mxu0 %v1336
        %v1483 = vpop.f32.mrf.mxu0
        %v1484 = vadd.f32 0.0, %v1483
        %v1485 = vpop.f32.mrf.mxu0
        %1486 = vmatprep.mubr.f32.mxu0 0.0
        %1487 = vmatmul.mubr.f32.gmra.mxu0 %v1337
        %v1488 = vpop.f32.mrf.mxu0
        %v1489 = vadd.f32 0.0, %v1488
        %v1490 = vpop.f32.mrf.mxu0
        %1491 = vmatprep.mubr.f32.mxu0 0.0
        %1492 = vmatmul.mubr.f32.gmra.mxu0 %v1338
        %v1493 = vpop.f32.mrf.mxu0
        %v1494 = vadd.f32 0.0, %v1493
        %v1495 = vpop.f32.mrf.mxu0
        %1496 = vmatprep.mubr.f32.mxu0 0.0
        %1497 = vmatmul.mubr.f32.gmra.mxu0 %v1339
        %v1498 = vpop.f32.mrf.mxu0
        %v1499 = vadd.f32 0.0, %v1498
        %v1500 = vpop.f32.mrf.mxu0
        %1501 = vdwg.mxu0
        %v1502 = vadd.f32 %v1305, %v1424
        %v1503 = vadd.f32 %v1306, %v1429
        %v1504 = vadd.f32 %v1307, %v1434
        %v1505 = vadd.f32 %v1308, %v1439
        %v1506 = vadd.f32 %v1309, %v1444
        %v1507 = vadd.f32 %v1310, %v1449
        %v1508 = vadd.f32 %v1311, %v1454
        %v1509 = vadd.f32 %v1312, %v1459
        %v1510 = vadd.f32 %v1313, %v1464
        %v1511 = vadd.f32 %v1314, %v1469
        %v1512 = vadd.f32 %v1315, %v1474
        %v1513 = vadd.f32 %v1316, %v1479
        %v1514 = vadd.f32 %v1317, %v1484
        %v1515 = vadd.f32 %v1318, %v1489
        %v1516 = vadd.f32 %v1319, %v1494
        %v1517 = vadd.f32 %v1320, %v1499
        %v1518 = vld [vmem:[%s1323 + $0x1] sm:$0xff]
        %v1519 = vld [vmem:[%s1323 + $0x9] sm:$0xff]
        %v1520 = vld [vmem:[%s1323 + $0x19] sm:$0xff]
        %v1521 = vld [vmem:[%s1323 + $0x21] sm:$0xff]
        %v1522 = vld [vmem:[%s1323 + $0x31] sm:$0xff]
        %v1523 = vld [vmem:[%s1323 + $0x39] sm:$0xff]
        %v1524 = vld [vmem:[%s1323 + $0x49] sm:$0xff]
        %v1525 = vld [vmem:[%s1323 + $0x51] sm:$0xff]
        %v1526 = vld [vmem:[%s1323 + $0x61] sm:$0xff]
        %v1527 = vld [vmem:[%s1323 + $0x69] sm:$0xff]
        %v1528 = vld [vmem:[%s1323 + $0x79] sm:$0xff]
        %v1529 = vld [vmem:[%s1323 + $0x81] sm:$0xff]
        %v1530 = vld [vmem:[%s1323 + $0x91] sm:$0xff]
        %v1531 = vld [vmem:[%s1323 + $0x99] sm:$0xff]
        %v1532 = vld [vmem:[%s1323 + $0xa9] sm:$0xff]
        %v1533 = vld [vmem:[%s1323 + $0xb1] sm:$0xff]
        %s1534 = scalar_lea.vmem %s1, 896
        %v1535 = vld [vmem:[%s1534] sm:$0xff]
        %v1536 = vld [vmem:[%s1534 + $0x8] sm:$0xff]
        %v1537 = vld [vmem:[%s1534 + $0x10] sm:$0xff]
        %v1538 = vld [vmem:[%s1534 + $0x18] sm:$0xff]
        %v1539 = vld [vmem:[%s1534 + $0x20] sm:$0xff]
        %v1540 = vld [vmem:[%s1534 + $0x28] sm:$0xff]
        %v1541 = vld [vmem:[%s1534 + $0x30] sm:$0xff]
        %v1542 = vld [vmem:[%s1534 + $0x38] sm:$0xff]
        %v1543 = vld [vmem:[%s1534 + $0x40] sm:$0xff]
        %v1544 = vld [vmem:[%s1534 + $0x48] sm:$0xff]
        %v1545 = vld [vmem:[%s1534 + $0x50] sm:$0xff]
        %v1546 = vld [vmem:[%s1534 + $0x58] sm:$0xff]
        %v1547 = vld [vmem:[%s1534 + $0x60] sm:$0xff]
        %v1548 = vld [vmem:[%s1534 + $0x68] sm:$0xff]
        %v1549 = vld [vmem:[%s1534 + $0x70] sm:$0xff]
        %v1550 = vld [vmem:[%s1534 + $0x78] sm:$0xff]
        %1551 = vmatprep.subr.mxu0 0.0
        %1552 = vmatpush1.msra.mxu0 %v1550
        %1553 = vmatprep.subr.mxu0 0.0
        %1554 = vmatpush1.msra.mxu0 %v1549
        %1555 = vmatprep.subr.mxu0 0.0
        %1556 = vmatpush1.msra.mxu0 %v1548
        %1557 = vmatprep.subr.mxu0 0.0
        %1558 = vmatpush1.msra.mxu0 %v1547
        %1559 = vmatprep.subr.mxu0 0.0
        %1560 = vmatpush1.msra.mxu0 %v1546
        %1561 = vmatprep.subr.mxu0 0.0
        %1562 = vmatpush1.msra.mxu0 %v1545
        %1563 = vmatprep.subr.mxu0 0.0
        %1564 = vmatpush1.msra.mxu0 %v1544
        %1565 = vmatprep.subr.mxu0 0.0
        %1566 = vmatpush1.msra.mxu0 %v1543
        %1567 = vmatprep.subr.mxu0 0.0
        %1568 = vmatpush1.msra.mxu0 %v1542
        %1569 = vmatprep.subr.mxu0 0.0
        %1570 = vmatpush1.msra.mxu0 %v1541
        %1571 = vmatprep.subr.mxu0 0.0
        %1572 = vmatpush1.msra.mxu0 %v1540
        %1573 = vmatprep.subr.mxu0 0.0
        %1574 = vmatpush1.msra.mxu0 %v1539
        %1575 = vmatprep.subr.mxu0 0.0
        %1576 = vmatpush1.msra.mxu0 %v1538
        %1577 = vmatprep.subr.mxu0 0.0
        %1578 = vmatpush1.msra.mxu0 %v1537
        %1579 = vmatprep.subr.mxu0 0.0
        %1580 = vmatpush1.msra.mxu0 %v1536
        %1581 = vmatprep.subr.mxu0 0.0
        %1582 = vmatpush1.msra.mxu0 %v1535
        %1583 = vmatprep.subr.mxu0 0.0
        %1584 = vmatpush2.msra.mxu0 0.0
        %1585 = vmatprep.subr.mxu0 0.0
        %1586 = vmatpush2.msra.mxu0 0.0
        %1587 = vmatprep.subr.mxu0 0.0
        %1588 = vmatpush2.msra.mxu0 0.0
        %1589 = vmatprep.subr.mxu0 0.0
        %1590 = vmatpush2.msra.mxu0 0.0
        %1591 = vmatprep.subr.mxu0 0.0
        %1592 = vmatpush2.msra.mxu0 0.0
        %1593 = vmatprep.subr.mxu0 0.0
        %1594 = vmatpush2.msra.mxu0 0.0
        %1595 = vmatprep.subr.mxu0 0.0
        %1596 = vmatpush2.msra.mxu0 0.0
        %1597 = vmatprep.subr.mxu0 0.0
        %1598 = vmatpush2.msra.mxu0 0.0
        %1599 = vmatprep.subr.mxu0 0.0
        %1600 = vmatpush2.msra.mxu0 0.0
        %1601 = vmatprep.subr.mxu0 0.0
        %1602 = vmatpush2.msra.mxu0 0.0
        %1603 = vmatprep.subr.mxu0 0.0
        %1604 = vmatpush2.msra.mxu0 0.0
        %1605 = vmatprep.subr.mxu0 0.0
        %1606 = vmatpush2.msra.mxu0 0.0
        %1607 = vmatprep.subr.mxu0 0.0
        %1608 = vmatpush2.msra.mxu0 0.0
        %1609 = vmatprep.subr.mxu0 0.0
        %1610 = vmatpush2.msra.mxu0 0.0
        %1611 = vmatprep.subr.mxu0 0.0
        %1612 = vmatpush2.msra.mxu0 0.0
        %1613 = vmatprep.subr.mxu0 0.0
        %1614 = vmatpush2.msra.mxu0 0.0
        %1615 = vmatprep.mubr.f32.mxu0 0.0
        %1616 = vmatmul.mubr.f32.gmra.mxu0 %v1518
        %v1617 = vpop.f32.mrf.mxu0
        %v1618 = vadd.f32 0.0, %v1617
        %v1619 = vpop.f32.mrf.mxu0
        %1620 = vmatprep.mubr.f32.mxu0 0.0
        %1621 = vmatmul.mubr.f32.gmra.mxu0 %v1519
        %v1622 = vpop.f32.mrf.mxu0
        %v1623 = vadd.f32 0.0, %v1622
        %v1624 = vpop.f32.mrf.mxu0
        %1625 = vmatprep.mubr.f32.mxu0 0.0
        %1626 = vmatmul.mubr.f32.gmra.mxu0 %v1520
        %v1627 = vpop.f32.mrf.mxu0
        %v1628 = vadd.f32 0.0, %v1627
        %v1629 = vpop.f32.mrf.mxu0
        %1630 = vmatprep.mubr.f32.mxu0 0.0
        %1631 = vmatmul.mubr.f32.gmra.mxu0 %v1521
        %v1632 = vpop.f32.mrf.mxu0
        %v1633 = vadd.f32 0.0, %v1632
        %v1634 = vpop.f32.mrf.mxu0
        %1635 = vmatprep.mubr.f32.mxu0 0.0
        %1636 = vmatmul.mubr.f32.gmra.mxu0 %v1522
        %v1637 = vpop.f32.mrf.mxu0
        %v1638 = vadd.f32 0.0, %v1637
        %v1639 = vpop.f32.mrf.mxu0
        %1640 = vmatprep.mubr.f32.mxu0 0.0
        %1641 = vmatmul.mubr.f32.gmra.mxu0 %v1523
        %v1642 = vpop.f32.mrf.mxu0
        %v1643 = vadd.f32 0.0, %v1642
        %v1644 = vpop.f32.mrf.mxu0
        %1645 = vmatprep.mubr.f32.mxu0 0.0
        %1646 = vmatmul.mubr.f32.gmra.mxu0 %v1524
        %v1647 = vpop.f32.mrf.mxu0
        %v1648 = vadd.f32 0.0, %v1647
        %v1649 = vpop.f32.mrf.mxu0
        %1650 = vmatprep.mubr.f32.mxu0 0.0
        %1651 = vmatmul.mubr.f32.gmra.mxu0 %v1525
        %v1652 = vpop.f32.mrf.mxu0
        %v1653 = vadd.f32 0.0, %v1652
        %v1654 = vpop.f32.mrf.mxu0
        %1655 = vmatprep.mubr.f32.mxu0 0.0
        %1656 = vmatmul.mubr.f32.gmra.mxu0 %v1526
        %v1657 = vpop.f32.mrf.mxu0
        %v1658 = vadd.f32 0.0, %v1657
        %v1659 = vpop.f32.mrf.mxu0
        %1660 = vmatprep.mubr.f32.mxu0 0.0
        %1661 = vmatmul.mubr.f32.gmra.mxu0 %v1527
        %v1662 = vpop.f32.mrf.mxu0
        %v1663 = vadd.f32 0.0, %v1662
        %v1664 = vpop.f32.mrf.mxu0
        %1665 = vmatprep.mubr.f32.mxu0 0.0
        %1666 = vmatmul.mubr.f32.gmra.mxu0 %v1528
        %v1667 = vpop.f32.mrf.mxu0
        %v1668 = vadd.f32 0.0, %v1667
        %v1669 = vpop.f32.mrf.mxu0
        %1670 = vmatprep.mubr.f32.mxu0 0.0
        %1671 = vmatmul.mubr.f32.gmra.mxu0 %v1529
        %v1672 = vpop.f32.mrf.mxu0
        %v1673 = vadd.f32 0.0, %v1672
        %v1674 = vpop.f32.mrf.mxu0
        %1675 = vmatprep.mubr.f32.mxu0 0.0
        %1676 = vmatmul.mubr.f32.gmra.mxu0 %v1530
        %v1677 = vpop.f32.mrf.mxu0
        %v1678 = vadd.f32 0.0, %v1677
        %v1679 = vpop.f32.mrf.mxu0
        %1680 = vmatprep.mubr.f32.mxu0 0.0
        %1681 = vmatmul.mubr.f32.gmra.mxu0 %v1531
        %v1682 = vpop.f32.mrf.mxu0
        %v1683 = vadd.f32 0.0, %v1682
        %v1684 = vpop.f32.mrf.mxu0
        %1685 = vmatprep.mubr.f32.mxu0 0.0
        %1686 = vmatmul.mubr.f32.gmra.mxu0 %v1532
        %v1687 = vpop.f32.mrf.mxu0
        %v1688 = vadd.f32 0.0, %v1687
        %v1689 = vpop.f32.mrf.mxu0
        %1690 = vmatprep.mubr.f32.mxu0 0.0
        %1691 = vmatmul.mubr.f32.gmra.mxu0 %v1533
        %v1692 = vpop.f32.mrf.mxu0
        %v1693 = vadd.f32 0.0, %v1692
        %v1694 = vpop.f32.mrf.mxu0
        %1695 = vdwg.mxu0
        %v1696 = vadd.f32 %v1502, %v1618
        %v1697 = vadd.f32 %v1503, %v1623
        %v1698 = vadd.f32 %v1504, %v1628
        %v1699 = vadd.f32 %v1505, %v1633
        %v1700 = vadd.f32 %v1506, %v1638
        %v1701 = vadd.f32 %v1507, %v1643
        %v1702 = vadd.f32 %v1508, %v1648
        %v1703 = vadd.f32 %v1509, %v1653
        %v1704 = vadd.f32 %v1510, %v1658
        %v1705 = vadd.f32 %v1511, %v1663
        %v1706 = vadd.f32 %v1512, %v1668
        %v1707 = vadd.f32 %v1513, %v1673
        %v1708 = vadd.f32 %v1514, %v1678
        %v1709 = vadd.f32 %v1515, %v1683
        %v1710 = vadd.f32 %v1516, %v1688
        %v1711 = vadd.f32 %v1517, %v1693
        %v1712 = vld [vmem:[%s1323 + $0x2] sm:$0xff]
        %v1713 = vld [vmem:[%s1323 + $0xa] sm:$0xff]
        %v1714 = vld [vmem:[%s1323 + $0x1a] sm:$0xff]
        %v1715 = vld [vmem:[%s1323 + $0x22] sm:$0xff]
        %v1716 = vld [vmem:[%s1323 + $0x32] sm:$0xff]
        %v1717 = vld [vmem:[%s1323 + $0x3a] sm:$0xff]
        %v1718 = vld [vmem:[%s1323 + $0x4a] sm:$0xff]
        %v1719 = vld [vmem:[%s1323 + $0x52] sm:$0xff]
        %v1720 = vld [vmem:[%s1323 + $0x62] sm:$0xff]
        %v1721 = vld [vmem:[%s1323 + $0x6a] sm:$0xff]
        %v1722 = vld [vmem:[%s1323 + $0x7a] sm:$0xff]
        %v1723 = vld [vmem:[%s1323 + $0x82] sm:$0xff]
        %v1724 = vld [vmem:[%s1323 + $0x92] sm:$0xff]
        %v1725 = vld [vmem:[%s1323 + $0x9a] sm:$0xff]
        %v1726 = vld [vmem:[%s1323 + $0xaa] sm:$0xff]
        %v1727 = vld [vmem:[%s1323 + $0xb2] sm:$0xff]
        %s1728 = scalar_lea.vmem %s1, 1024
        %v1729 = vld [vmem:[%s1728] sm:$0xff]
        %v1730 = vld [vmem:[%s1728 + $0x8] sm:$0xff]
        %v1731 = vld [vmem:[%s1728 + $0x10] sm:$0xff]
        %v1732 = vld [vmem:[%s1728 + $0x18] sm:$0xff]
        %v1733 = vld [vmem:[%s1728 + $0x20] sm:$0xff]
        %v1734 = vld [vmem:[%s1728 + $0x28] sm:$0xff]
        %v1735 = vld [vmem:[%s1728 + $0x30] sm:$0xff]
        %v1736 = vld [vmem:[%s1728 + $0x38] sm:$0xff]
        %v1737 = vld [vmem:[%s1728 + $0x40] sm:$0xff]
        %v1738 = vld [vmem:[%s1728 + $0x48] sm:$0xff]
        %v1739 = vld [vmem:[%s1728 + $0x50] sm:$0xff]
        %v1740 = vld [vmem:[%s1728 + $0x58] sm:$0xff]
        %v1741 = vld [vmem:[%s1728 + $0x60] sm:$0xff]
        %v1742 = vld [vmem:[%s1728 + $0x68] sm:$0xff]
        %v1743 = vld [vmem:[%s1728 + $0x70] sm:$0xff]
        %v1744 = vld [vmem:[%s1728 + $0x78] sm:$0xff]
        %1745 = vmatprep.subr.mxu0 0.0
        %1746 = vmatpush1.msra.mxu0 %v1744
        %1747 = vmatprep.subr.mxu0 0.0
        %1748 = vmatpush1.msra.mxu0 %v1743
        %1749 = vmatprep.subr.mxu0 0.0
        %1750 = vmatpush1.msra.mxu0 %v1742
        %1751 = vmatprep.subr.mxu0 0.0
        %1752 = vmatpush1.msra.mxu0 %v1741
        %1753 = vmatprep.subr.mxu0 0.0
        %1754 = vmatpush1.msra.mxu0 %v1740
        %1755 = vmatprep.subr.mxu0 0.0
        %1756 = vmatpush1.msra.mxu0 %v1739
        %1757 = vmatprep.subr.mxu0 0.0
        %1758 = vmatpush1.msra.mxu0 %v1738
        %1759 = vmatprep.subr.mxu0 0.0
        %1760 = vmatpush1.msra.mxu0 %v1737
        %1761 = vmatprep.subr.mxu0 0.0
        %1762 = vmatpush1.msra.mxu0 %v1736
        %1763 = vmatprep.subr.mxu0 0.0
        %1764 = vmatpush1.msra.mxu0 %v1735
        %1765 = vmatprep.subr.mxu0 0.0
        %1766 = vmatpush1.msra.mxu0 %v1734
        %1767 = vmatprep.subr.mxu0 0.0
        %1768 = vmatpush1.msra.mxu0 %v1733
        %1769 = vmatprep.subr.mxu0 0.0
        %1770 = vmatpush1.msra.mxu0 %v1732
        %1771 = vmatprep.subr.mxu0 0.0
        %1772 = vmatpush1.msra.mxu0 %v1731
        %1773 = vmatprep.subr.mxu0 0.0
        %1774 = vmatpush1.msra.mxu0 %v1730
        %1775 = vmatprep.subr.mxu0 0.0
        %1776 = vmatpush1.msra.mxu0 %v1729
        %1777 = vmatprep.subr.mxu0 0.0
        %1778 = vmatpush2.msra.mxu0 0.0
        %1779 = vmatprep.subr.mxu0 0.0
        %1780 = vmatpush2.msra.mxu0 0.0
        %1781 = vmatprep.subr.mxu0 0.0
        %1782 = vmatpush2.msra.mxu0 0.0
        %1783 = vmatprep.subr.mxu0 0.0
        %1784 = vmatpush2.msra.mxu0 0.0
        %1785 = vmatprep.subr.mxu0 0.0
        %1786 = vmatpush2.msra.mxu0 0.0
        %1787 = vmatprep.subr.mxu0 0.0
        %1788 = vmatpush2.msra.mxu0 0.0
        %1789 = vmatprep.subr.mxu0 0.0
        %1790 = vmatpush2.msra.mxu0 0.0
        %1791 = vmatprep.subr.mxu0 0.0
        %1792 = vmatpush2.msra.mxu0 0.0
        %1793 = vmatprep.subr.mxu0 0.0
        %1794 = vmatpush2.msra.mxu0 0.0
        %1795 = vmatprep.subr.mxu0 0.0
        %1796 = vmatpush2.msra.mxu0 0.0
        %1797 = vmatprep.subr.mxu0 0.0
        %1798 = vmatpush2.msra.mxu0 0.0
        %1799 = vmatprep.subr.mxu0 0.0
        %1800 = vmatpush2.msra.mxu0 0.0
        %1801 = vmatprep.subr.mxu0 0.0
        %1802 = vmatpush2.msra.mxu0 0.0
        %1803 = vmatprep.subr.mxu0 0.0
        %1804 = vmatpush2.msra.mxu0 0.0
        %1805 = vmatprep.subr.mxu0 0.0
        %1806 = vmatpush2.msra.mxu0 0.0
        %1807 = vmatprep.subr.mxu0 0.0
        %1808 = vmatpush2.msra.mxu0 0.0
        %1809 = vmatprep.mubr.f32.mxu0 0.0
        %1810 = vmatmul.mubr.f32.gmra.mxu0 %v1712
        %v1811 = vpop.f32.mrf.mxu0
        %v1812 = vadd.f32 0.0, %v1811
        %v1813 = vpop.f32.mrf.mxu0
        %1814 = vmatprep.mubr.f32.mxu0 0.0
        %1815 = vmatmul.mubr.f32.gmra.mxu0 %v1713
        %v1816 = vpop.f32.mrf.mxu0
        %v1817 = vadd.f32 0.0, %v1816
        %v1818 = vpop.f32.mrf.mxu0
        %1819 = vmatprep.mubr.f32.mxu0 0.0
        %1820 = vmatmul.mubr.f32.gmra.mxu0 %v1714
        %v1821 = vpop.f32.mrf.mxu0
        %v1822 = vadd.f32 0.0, %v1821
        %v1823 = vpop.f32.mrf.mxu0
        %1824 = vmatprep.mubr.f32.mxu0 0.0
        %1825 = vmatmul.mubr.f32.gmra.mxu0 %v1715
        %v1826 = vpop.f32.mrf.mxu0
        %v1827 = vadd.f32 0.0, %v1826
        %v1828 = vpop.f32.mrf.mxu0
        %1829 = vmatprep.mubr.f32.mxu0 0.0
        %1830 = vmatmul.mubr.f32.gmra.mxu0 %v1716
        %v1831 = vpop.f32.mrf.mxu0
        %v1832 = vadd.f32 0.0, %v1831
        %v1833 = vpop.f32.mrf.mxu0
        %1834 = vmatprep.mubr.f32.mxu0 0.0
        %1835 = vmatmul.mubr.f32.gmra.mxu0 %v1717
        %v1836 = vpop.f32.mrf.mxu0
        %v1837 = vadd.f32 0.0, %v1836
        %v1838 = vpop.f32.mrf.mxu0
        %1839 = vmatprep.mubr.f32.mxu0 0.0
        %1840 = vmatmul.mubr.f32.gmra.mxu0 %v1718
        %v1841 = vpop.f32.mrf.mxu0
        %v1842 = vadd.f32 0.0, %v1841
        %v1843 = vpop.f32.mrf.mxu0
        %1844 = vmatprep.mubr.f32.mxu0 0.0
        %1845 = vmatmul.mubr.f32.gmra.mxu0 %v1719
        %v1846 = vpop.f32.mrf.mxu0
        %v1847 = vadd.f32 0.0, %v1846
        %v1848 = vpop.f32.mrf.mxu0
        %1849 = vmatprep.mubr.f32.mxu0 0.0
        %1850 = vmatmul.mubr.f32.gmra.mxu0 %v1720
        %v1851 = vpop.f32.mrf.mxu0
        %v1852 = vadd.f32 0.0, %v1851
        %v1853 = vpop.f32.mrf.mxu0
        %1854 = vmatprep.mubr.f32.mxu0 0.0
        %1855 = vmatmul.mubr.f32.gmra.mxu0 %v1721
        %v1856 = vpop.f32.mrf.mxu0
        %v1857 = vadd.f32 0.0, %v1856
        %v1858 = vpop.f32.mrf.mxu0
        %1859 = vmatprep.mubr.f32.mxu0 0.0
        %1860 = vmatmul.mubr.f32.gmra.mxu0 %v1722
        %v1861 = vpop.f32.mrf.mxu0
        %v1862 = vadd.f32 0.0, %v1861
        %v1863 = vpop.f32.mrf.mxu0
        %1864 = vmatprep.mubr.f32.mxu0 0.0
        %1865 = vmatmul.mubr.f32.gmra.mxu0 %v1723
        %v1866 = vpop.f32.mrf.mxu0
        %v1867 = vadd.f32 0.0, %v1866
        %v1868 = vpop.f32.mrf.mxu0
        %1869 = vmatprep.mubr.f32.mxu0 0.0
        %1870 = vmatmul.mubr.f32.gmra.mxu0 %v1724
        %v1871 = vpop.f32.mrf.mxu0
        %v1872 = vadd.f32 0.0, %v1871
        %v1873 = vpop.f32.mrf.mxu0
        %1874 = vmatprep.mubr.f32.mxu0 0.0
        %1875 = vmatmul.mubr.f32.gmra.mxu0 %v1725
        %v1876 = vpop.f32.mrf.mxu0
        %v1877 = vadd.f32 0.0, %v1876
        %v1878 = vpop.f32.mrf.mxu0
        %1879 = vmatprep.mubr.f32.mxu0 0.0
        %1880 = vmatmul.mubr.f32.gmra.mxu0 %v1726
        %v1881 = vpop.f32.mrf.mxu0
        %v1882 = vadd.f32 0.0, %v1881
        %v1883 = vpop.f32.mrf.mxu0
        %1884 = vmatprep.mubr.f32.mxu0 0.0
        %1885 = vmatmul.mubr.f32.gmra.mxu0 %v1727
        %v1886 = vpop.f32.mrf.mxu0
        %v1887 = vadd.f32 0.0, %v1886
        %v1888 = vpop.f32.mrf.mxu0
        %1889 = vdwg.mxu0
        %v1890 = vadd.f32 %v1696, %v1812
        %v1891 = vadd.f32 %v1697, %v1817
        %v1892 = vadd.f32 %v1698, %v1822
        %v1893 = vadd.f32 %v1699, %v1827
        %v1894 = vadd.f32 %v1700, %v1832
        %v1895 = vadd.f32 %v1701, %v1837
        %v1896 = vadd.f32 %v1702, %v1842
        %v1897 = vadd.f32 %v1703, %v1847
        %v1898 = vadd.f32 %v1704, %v1852
        %v1899 = vadd.f32 %v1705, %v1857
        %v1900 = vadd.f32 %v1706, %v1862
        %v1901 = vadd.f32 %v1707, %v1867
        %v1902 = vadd.f32 %v1708, %v1872
        %v1903 = vadd.f32 %v1709, %v1877
        %v1904 = vadd.f32 %v1710, %v1882
        %v1905 = vadd.f32 %v1711, %v1887
        %v1906 = vld [vmem:[%s2] sm:$0x1]
        %v1908 = vlaneseq
        %v1909 = vshrl.u32 %v1908, 7
        %v1910 = vsub.s32 0, %v1909
        %v1911 = vrot.slane %v1906, %v1910
        %v1913 = vadd.f32 %v1890, %v1911
        %v1914 = vadd.f32 %v1891, %v1911
        %v1915 = vadd.f32 %v1892, %v1911
        %v1916 = vadd.f32 %v1893, %v1911
        %v1917 = vadd.f32 %v1894, %v1911
        %v1918 = vadd.f32 %v1895, %v1911
        %v1919 = vadd.f32 %v1896, %v1911
        %v1920 = vadd.f32 %v1897, %v1911
        %v1921 = vadd.f32 %v1898, %v1911
        %v1922 = vadd.f32 %v1899, %v1911
        %v1923 = vadd.f32 %v1900, %v1911
        %v1924 = vadd.f32 %v1901, %v1911
        %v1925 = vadd.f32 %v1902, %v1911
        %v1926 = vadd.f32 %v1903, %v1911
        %v1927 = vadd.f32 %v1904, %v1911
        %v1928 = vadd.f32 %v1905, %v1911
        %v1929 = vmax.f32 %v1913, 0.0
        %v1930 = vmax.f32 %v1914, 0.0
        %v1931 = vmax.f32 %v1915, 0.0
        %v1932 = vmax.f32 %v1916, 0.0
        %v1933 = vmax.f32 %v1917, 0.0
        %v1934 = vmax.f32 %v1918, 0.0
        %v1935 = vmax.f32 %v1919, 0.0
        %v1936 = vmax.f32 %v1920, 0.0
        %v1937 = vmax.f32 %v1921, 0.0
        %v1938 = vmax.f32 %v1922, 0.0
        %v1939 = vmax.f32 %v1923, 0.0
        %v1940 = vmax.f32 %v1924, 0.0
        %v1941 = vmax.f32 %v1925, 0.0
        %v1942 = vmax.f32 %v1926, 0.0
        %v1943 = vmax.f32 %v1927, 0.0
        %v1944 = vmax.f32 %v1928, 0.0
        %1945 = vst [vmem:[%s177] sm:$0xff] %v1929
        %1946 = vst [vmem:[%s177 + $0x8] sm:$0xff] %v1930
        %1947 = vst [vmem:[%s177 + $0x10] sm:$0xff] %v1931
        %1948 = vst [vmem:[%s177 + $0x18] sm:$0xff] %v1932
        %1949 = vst [vmem:[%s177 + $0x20] sm:$0xff] %v1933
        %1950 = vst [vmem:[%s177 + $0x28] sm:$0xff] %v1934
        %1951 = vst [vmem:[%s177 + $0x30] sm:$0xff] %v1935
        %1952 = vst [vmem:[%s177 + $0x38] sm:$0xff] %v1936
        %1953 = vst [vmem:[%s177 + $0x40] sm:$0xff] %v1937
        %1954 = vst [vmem:[%s177 + $0x48] sm:$0xff] %v1938
        %1955 = vst [vmem:[%s177 + $0x50] sm:$0xff] %v1939
        %1956 = vst [vmem:[%s177 + $0x58] sm:$0xff] %v1940
        %1957 = vst [vmem:[%s177 + $0x60] sm:$0xff] %v1941
        %1958 = vst [vmem:[%s177 + $0x68] sm:$0xff] %v1942
        %1959 = vst [vmem:[%s177 + $0x70] sm:$0xff] %v1943
        %1960 = vst [vmem:[%s177 + $0x78] sm:$0xff] %v1944
        %s1961 = sand.u32 %s107, 1
        %s1962 = scalar_lea.sflag [#allocation3], %s1961
        %s1963 = sand.u32 %s107, 1
        %s1964 = smul.addr %s1963, 128
        %s1965 = scalar_lea.vmem [#allocation2], %s1964
        // Predicated region
        $region33: #{tpu_custom_call.1} parent=31 // pred_check
          %p1966 = pneg %p117
        $region34: #{tpu_custom_call.1} parent=31 // pred_check_branch
          %1968 = sbr.rel (%p1966) target = $region36
        $region35: #{tpu_custom_call.1} parent=31 // pred_region
          %s1969 = smul.u32 8, %s22
          %s1971 = ssub.s32 2048, 2048
          %1972 = vsyncadd %s1962, %s1971
          %s1973 = smul.addr %s1969, 2
          %s1974 = smul.addr %s21, 32
          %s1975 = sadd.s32 %s1973, %s1974
          %s1976 = smul.addr %s1975, 128
          %s1977 = scalar_lea.hbm %s3, %s1976
          %s1978 = sshll.u32 %s1965, 4
          %s1979 = int_to_ptr.vmem [resolvable:$true] %s1978
          %1984 = dma.vmem_to_hbm [thread:$0]  %s1979, 2048, %s1977, %s1962, 128, 128, 8
        $region36: #{tpu_custom_call.1} parent=31 // pred_fallthru
          _
      $region32: #{tpu_custom_call.1} parent=5 // pred_fallthru
        _
      %p1985 = scmp.le.s32.totalorder 2, %s12
      // Predicated region
      $region37: #{tpu_custom_call.1} parent=5 // pred_check
        %p1986 = pneg %p1985
      $region38: #{tpu_custom_call.1} parent=5 // pred_check_branch
        %1988 = sbr.rel (%p1986) target = $region40
      $region39: #{tpu_custom_call.1} parent=5 // pred_region
        %s1989 = ssub.s32 %s12, 2
        // Predicated region
        $region41: #{tpu_custom_call.1} parent=39 // pred_check
          %p1990 = pneg %p123
        $region42: #{tpu_custom_call.1} parent=39 // pred_check_branch
          %1992 = sbr.rel (%p1990) target = $region44
        $region43: #{tpu_custom_call.1} parent=39 // pred_region
          %s1993 = sand.u32 %s108, 1
          %s1994 = scalar_lea.sflag [#allocation3], %s1993
          %s1995 = sand.u32 %s108, 1
          %s1996 = smul.addr %s1995, 128
          %s1997 = scalar_lea.vmem [#allocation2], %s1996
          %1998 = dma.done %s1994, 2048
        $region44: #{tpu_custom_call.1} parent=39 // pred_fallthru
          _
      $region40: #{tpu_custom_call.1} parent=5 // pred_fallthru
        _
    $region6: #{tpu_custom_call.1} parent=1 // loop_footer
      %s16 = sadd.s32 1, %s12
    $region7: #{tpu_custom_call.1} parent=1 // loop_footer_branch
      %11 = sbr.rel target = $region3
    $region8: #{tpu_custom_call.1} parent=1 // loop_exit
      _
    %1999 = vsyncpa [#allocation3], 1
    %s2000 = scalar_lea.sflag [#allocation3], 1
    %2001 = vsyncpa %s2000, 1

</llo_original>
